<compile_context>
chip_gen: v7x
topology: tpu7x:2x2x1
jax: 0.10.0
libtpu: 0.0.40
codegen_flags: <defaults>
</compile_context>

<pallas_src>
import functools

import numpy as np
import jax
import jax.numpy as jnp
from jax.experimental import pallas as pl
from jax.experimental.pallas import tpu as pltpu

EPS = 1e-5


# ----------------------------------------------------------------------------
# Constant pool/shift/pad matrices (tiny, built once in the wrapper).
# P[j] : (W_in, Wo).  x_row (W_in) @ P[j] = pooled row, shifted horizontally by
# (j-1)*d for depthwise tap column j, with zeros where the shift runs off the
# image (i.e. the horizontal zero padding of padding=dilation).
# ----------------------------------------------------------------------------
def _pool_shift_matrices(stride, d, W, Wo, W_in):
    P = np.zeros((3, W_in, Wo), np.float32)
    for j in range(3):
        for wo in range(Wo):
            src = wo + (j - 1) * d           # column index in the pooled image
            if 0 <= src < Wo:
                if stride == 2:
                    # input row layout is [row 2i | row 2i+1] of length 2W
                    for w in (2 * src, 2 * src + 1, W + 2 * src, W + 2 * src + 1):
                        P[j, w, wo] = 0.25
                else:
                    P[j, src, wo] = 1.0
    return jnp.asarray(P)


# ----------------------------------------------------------------------------
# Fused kernel: avgpool + depthwise 3x3 (dilated) + BN2 + ReLU
#                       + 1x1 conv + BN1 + ReLU.
# ----------------------------------------------------------------------------
def _make_kernel(N, Cin, Cout, Ho, Wo, Hp, d):
    def kernel(x_ref, p_ref, w2_ref, w1_ref, g2_ref, b2_ref, g1_ref, b1_ref,
               o_ref, canvas_ref, z1_ref):
        n = pl.program_id(0)

        # Zero the vertically padded canvas once; only its interior rows are
        # rewritten below, so the zero padding stays valid for every sample.
        @pl.when(n == 0)
        def _init():
            canvas_ref[...] = jnp.zeros_like(canvas_ref)

        # -- avg-pool + horizontal tap shift + horizontal zero-pad: 1 matmul/tap
        xv = x_ref[0]                                            # (Cin*Ho, W_in)
        for j in range(3):
            sj = jnp.dot(xv, p_ref[j], preferred_element_type=jnp.float32)
            canvas_ref[j, :, d:d + Ho, :] = sj.reshape(Cin, Ho, Wo)

        # -- dilated 3x3 depthwise conv: 9 VPU broadcast-MACs over the canvas
        acc = jnp.zeros((Cin, Ho, Wo), jnp.float32)
        for i in range(3):
            for j in range(3):
                tap = canvas_ref[j, :, i * d:i * d + Ho, :]      # (Cin, Ho, Wo)
                acc = acc + tap * w2_ref[3 * i + j]              # (Cin, 1, Wo)
        z1_ref[n] = acc                                          # pre-BN result

        # -- epilogue on the last sample: BN2(train)+ReLU, 1x1 conv,
        #    BN1(train)+ReLU, lane-dense (W on lanes) output store.
        @pl.when(n == N - 1)
        def _finalize():
            inv_cnt = 1.0 / float(N * Ho * Wo)
            a1 = []
            for c in range(Cin):
                zc = z1_ref[:, c, :, :]                          # (N, Ho, Wo)
                m = jnp.sum(zc) * inv_cnt
                v = jnp.sum(jnp.square(zc - m)) * inv_cnt
                zn = (zc - m) * jax.lax.rsqrt(v + EPS) * g2_ref[c] + b2_ref[c]
                a1.append(jnp.maximum(zn, 0.0))
            for co in range(Cout):
                t = a1[0] * w1_ref[co, 0]                        # scalar-weight MACs
                for ci in range(1, Cin):
                    t = t + a1[ci] * w1_ref[co, ci]
                m = jnp.sum(t) * inv_cnt
                v = jnp.sum(jnp.square(t - m)) * inv_cnt
                tn = (t - m) * jax.lax.rsqrt(v + EPS) * g1_ref[co] + b1_ref[co]
                o_ref[:, co, :, :] = jnp.maximum(tn, 0.0)

    return kernel


# ----------------------------------------------------------------------------
# Wrapper: NCHW in -> NCHW out.  All wrapper-side reshapes are of contiguous
# arrays (free); only tiny weight/constant arrays are rearranged.
# ----------------------------------------------------------------------------
def cdblock3_pallas(x_nchw, params, stride, dilation):
    N, Cin, H, W = x_nchw.shape
    d = int(dilation)
    Cout = params["w1"].shape[0]

    if stride == 2:
        # TODO(synk): AvgPool2d(2,2,ceil_mode=True) partial edge windows for
        # odd H/W are not implemented (the even-dims case below is exact).
        assert H % 2 == 0 and W % 2 == 0, "odd spatial dims not supported"
        Ho, Wo, W_in = H // 2, W // 2, 2 * W
    else:
        Ho, Wo, W_in = H, W, W
    Hp = Ho + 2 * d
    R = Cin * Ho

    # (N, Cin, H, W) -> (N, Cin*Ho, W_in): contiguous, i.e. a free reshape.
    x_in = x_nchw.reshape(N, R, W_in)
    p_all = _pool_shift_matrices(stride, d, W, Wo, W_in)         # (3, W_in, Wo)
    # depthwise weights, per-tap, broadcast along the lane (W) axis.
    w2_flat = jnp.transpose(params["w2"].reshape(Cin, 9), (1, 0))      # (9, Cin)
    w2_k = jnp.broadcast_to(w2_flat.reshape(9, Cin, 1, 1), (9, Cin, 1, Wo))
    w1_2d = params["w1"].reshape(Cout, Cin)                      # 1x1 weights

    smem = lambda: pl.BlockSpec(memory_space=pltpu.MemorySpace.SMEM)

    out = pl.pallas_call(
        _make_kernel(N, Cin, Cout, Ho, Wo, Hp, d),
        out_shape=jax.ShapeDtypeStruct((N, Cout, Ho, Wo), jnp.float32),
        grid=(N,),
        in_specs=[
            pl.BlockSpec((1, R, W_in), lambda n: (n, 0, 0)),      # x, pipelined/n
            pl.BlockSpec((3, W_in, Wo), lambda n: (0, 0, 0)),     # pool/shift mats
            pl.BlockSpec((9, Cin, 1, Wo), lambda n: (0, 0, 0, 0)),  # dw weights
            smem(),   # w1 (Cout, Cin)
            smem(),   # gamma2 (Cin,)
            smem(),   # beta2  (Cin,)
            smem(),   # gamma1 (Cout,)
            smem(),   # beta1  (Cout,)
        ],
        out_specs=pl.BlockSpec((N, Cout, Ho, Wo), lambda n: (0, 0, 0, 0)),
        scratch_shapes=[
            pltpu.VMEM((3, Cin, Hp, Wo), jnp.float32),   # shifted, zero-padded canvas
            pltpu.VMEM((N, Cin, Ho, Wo), jnp.float32),   # depthwise output (pre-BN)
        ],
        compiler_params=pltpu.CompilerParams(
            dimension_semantics=("arbitrary",),          # BN needs global batch stats
            vmem_limit_bytes=32 * 1024 * 1024,
        ),
    )(x_in, p_all, w2_k, w1_2d,
      params["g2"], params["b2"], params["g1"], params["b1"])
    return out


# ----------------------------------------------------------------------------
# Pure-JAX (XLA) reference for verification.
# ----------------------------------------------------------------------------
def _bn_train(y, g, b):
    mean = jnp.mean(y, axis=(0, 2, 3), keepdims=True)
    var = jnp.mean(jnp.square(y - mean), axis=(0, 2, 3), keepdims=True)
    return (y - mean) * jax.lax.rsqrt(var + EPS) * g.reshape(1, -1, 1, 1) \
        + b.reshape(1, -1, 1, 1)


def cdblock3_ref(x, params, stride, dilation):
    d = int(dilation)
    N, Cin, H, W = x.shape
    if stride == 2:
        x = x.reshape(N, Cin, H // 2, 2, W // 2, 2).mean(axis=(3, 5))
    y = jax.lax.conv_general_dilated(
        x, params["w2"], window_strides=(1, 1), padding=((d, d), (d, d)),
        rhs_dilation=(d, d), dimension_numbers=("NCHW", "OIHW", "NCHW"),
        feature_group_count=Cin)
    y = jnp.maximum(_bn_train(y, params["g2"], params["b2"]), 0.0)
    z = jax.lax.conv_general_dilated(
        y, params["w1"], window_strides=(1, 1), padding="VALID",
        dimension_numbers=("NCHW", "OIHW", "NCHW"))
    z = jnp.maximum(_bn_train(z, params["g1"], params["b1"]), 0.0)
    return z


if __name__ == "__main__":
    # CDBlock_3(in_channels=4, out_channels=8, dilations=[2], stride=2) on
    # x of shape (2, 4, 16, 16).
    N, Cin, H, W = 2, 4, 16, 16
    Cout, stride, dilation = 8, 2, 2

    key = jax.random.PRNGKey(0)
    k0, k1, k2, k3, k4, k5, k6 = jax.random.split(key, 7)

    x = jax.random.normal(k0, (N, Cin, H, W), dtype=jnp.float32)
    params = {
        "w2": 0.3 * jax.random.normal(k1, (Cin, 1, 3, 3), dtype=jnp.float32),
        "w1": 0.3 * jax.random.normal(k2, (Cout, Cin, 1, 1), dtype=jnp.float32),
        "g2": 1.0 + 0.1 * jax.random.normal(k3, (Cin,), dtype=jnp.float32),
        "b2": 0.1 * jax.random.normal(k4, (Cin,), dtype=jnp.float32),
        "g1": 1.0 + 0.1 * jax.random.normal(k5, (Cout,), dtype=jnp.float32),
        "b1": 0.05 * jax.random.normal(k6, (Cout,), dtype=jnp.float32),
    }

    fwd = jax.jit(functools.partial(cdblock3_pallas, stride=stride,
                                    dilation=dilation))
    ref_fn = jax.jit(functools.partial(cdblock3_ref, stride=stride,
                                       dilation=dilation))

    out = jax.block_until_ready(fwd(x, params))
    ref = jax.block_until_ready(ref_fn(x, params))

    assert out.shape == (N, Cout, H // 2, W // 2), out.shape
    err = float(jnp.max(jnp.abs(out - ref)))
    assert err < 2e-3, err
    print("KERNEL_OK")
</pallas_src>

<mosaic_0001>
module attributes {stable_mosaic.version = 11 : i64} {
  func.func @kernel(%arg0: i32, %arg1: memref<1x32x32xf32, #tpu.memory_space<vmem>>, %arg2: memref<3x32x8xf32, #tpu.memory_space<vmem>>, %arg3: memref<9x4x1x8xf32, #tpu.memory_space<vmem>>, %arg4: memref<8x4xf32, #tpu.memory_space<smem>>, %arg5: memref<4xf32, #tpu.memory_space<smem>>, %arg6: memref<4xf32, #tpu.memory_space<smem>>, %arg7: memref<8xf32, #tpu.memory_space<smem>>, %arg8: memref<8xf32, #tpu.memory_space<smem>>, %arg9: memref<2x8x8x8xf32, #tpu.memory_space<vmem>>, %arg10: memref<3x4x12x8xf32, #tpu.memory_space<vmem>>, %arg11: memref<2x4x8x8xf32, #tpu.memory_space<vmem>>) attributes {dimension_semantics = [#tpu.dimension_semantics<arbitrary>], iteration_bounds = array<i64: 2>, scalar_prefetch = 0 : i64, scratch_operands = 2 : i64, tpu.core_type = #tpu.core_type<tc>, window_params = [{transform_indices = @transform_0, window_bounds = array<i64: 1, 32, 32>}, {pipeline_mode = #tpu.pipeline_mode<synchronous>, transform_indices = @transform_1, window_bounds = array<i64: 3, 32, 8>}, {pipeline_mode = #tpu.pipeline_mode<synchronous>, transform_indices = @transform_2, window_bounds = array<i64: 9, 4, 1, 8>}, {transform_indices = @transform_3, window_bounds = array<i64: 8, 4>}, {transform_indices = @transform_4, window_bounds = array<i64: 4>}, {transform_indices = @transform_5, window_bounds = array<i64: 4>}, {transform_indices = @transform_6, window_bounds = array<i64: 8>}, {transform_indices = @transform_7, window_bounds = array<i64: 8>}, {pipeline_mode = #tpu.pipeline_mode<synchronous>, transform_indices = @transform_8, window_bounds = array<i64: 2, 8, 8, 8>}]} {
    %c0_i32 = arith.constant 0 : i32
    %0 = arith.cmpi eq, %arg0, %c0_i32 : i32
    %1 = arith.extui %0 : i1 to i32
    %c0_i32_0 = arith.constant 0 : i32
    %2 = arith.cmpi ne, %1, %c0_i32_0 : i32
    scf.if %2 {
      %cst_95 = arith.constant 0.000000e+00 : f32
      %97 = vector.broadcast %cst_95 : f32 to vector<3x4x12x8xf32>
      %c0_96 = arith.constant 0 : index
      %c0_97 = arith.constant 0 : index
      %c0_98 = arith.constant 0 : index
      %c0_99 = arith.constant 0 : index
      %98 = vector.load %arg10[%c0_96, %c0_97, %c0_98, %c0_99] : memref<3x4x12x8xf32, #tpu.memory_space<vmem>>, vector<3x4x12x8xf32>
      tpu.vector_store %arg10[%c0_96, %c0_97, %c0_98, %c0_99], %97 {strides = array<i32>} : memref<3x4x12x8xf32, #tpu.memory_space<vmem>>, vector<3x4x12x8xf32>,
    } else {
    }
    %c0 = arith.constant 0 : index
    %c0_1 = arith.constant 0 : index
    %c0_2 = arith.constant 0 : index
    %3 = vector.load %arg1[%c0, %c0_1, %c0_2] : memref<1x32x32xf32, #tpu.memory_space<vmem>>, vector<1x32x32xf32>
    %4 = vector.shape_cast %3 : vector<1x32x32xf32> to vector<32x32xf32>
    %c0_3 = arith.constant 0 : index
    %c0_4 = arith.constant 0 : index
    %c0_5 = arith.constant 0 : index
    %5 = vector.load %arg2[%c0_3, %c0_4, %c0_5] : memref<3x32x8xf32, #tpu.memory_space<vmem>>, vector<1x32x8xf32>
    %6 = vector.shape_cast %5 : vector<1x32x8xf32> to vector<32x8xf32>
    %cst = arith.constant dense<0.000000e+00> : vector<32x8xf32>
    %7 = tpu.matmul %4, %6, %cst {dimension_numbers = #tpu.dot_dimension_numbers<[1], [0], [0], [1], [0, 0, 1, 1], [], []>} : vector<32x32xf32>, vector<32x8xf32>, vector<32x8xf32> -> vector<32x8xf32>
    %8 = vector.shape_cast %7 : vector<32x8xf32> to vector<4x8x8xf32>
    %c0_6 = arith.constant 0 : index
    %c0_7 = arith.constant 0 : index
    %c2 = arith.constant 2 : index
    %c0_8 = arith.constant 0 : index
    %9 = vector.load %arg10[%c0_6, %c0_7, %c2, %c0_8] : memref<3x4x12x8xf32, #tpu.memory_space<vmem>>, vector<1x4x8x8xf32>
    %10 = vector.shape_cast %9 : vector<1x4x8x8xf32> to vector<4x8x8xf32>
    %11 = vector.shape_cast %8 : vector<4x8x8xf32> to vector<1x4x8x8xf32>
    tpu.vector_store %arg10[%c0_6, %c0_7, %c2, %c0_8], %11 {strides = array<i32>} : memref<3x4x12x8xf32, #tpu.memory_space<vmem>>, vector<1x4x8x8xf32>,
    %c1 = arith.constant 1 : index
    %c0_9 = arith.constant 0 : index
    %c0_10 = arith.constant 0 : index
    %12 = vector.load %arg2[%c1, %c0_9, %c0_10] : memref<3x32x8xf32, #tpu.memory_space<vmem>>, vector<1x32x8xf32>
    %13 = vector.shape_cast %12 : vector<1x32x8xf32> to vector<32x8xf32>
    %cst_11 = arith.constant dense<0.000000e+00> : vector<32x8xf32>
    %14 = tpu.matmul %4, %13, %cst_11 {dimension_numbers = #tpu.dot_dimension_numbers<[1], [0], [0], [1], [0, 0, 1, 1], [], []>} : vector<32x32xf32>, vector<32x8xf32>, vector<32x8xf32> -> vector<32x8xf32>
    %15 = vector.shape_cast %14 : vector<32x8xf32> to vector<4x8x8xf32>
    %c1_12 = arith.constant 1 : index
    %c0_13 = arith.constant 0 : index
    %c2_14 = arith.constant 2 : index
    %c0_15 = arith.constant 0 : index
    %16 = vector.load %arg10[%c1_12, %c0_13, %c2_14, %c0_15] : memref<3x4x12x8xf32, #tpu.memory_space<vmem>>, vector<1x4x8x8xf32>
    %17 = vector.shape_cast %16 : vector<1x4x8x8xf32> to vector<4x8x8xf32>
    %18 = vector.shape_cast %15 : vector<4x8x8xf32> to vector<1x4x8x8xf32>
    tpu.vector_store %arg10[%c1_12, %c0_13, %c2_14, %c0_15], %18 {strides = array<i32>} : memref<3x4x12x8xf32, #tpu.memory_space<vmem>>, vector<1x4x8x8xf32>,
    %c2_16 = arith.constant 2 : index
    %c0_17 = arith.constant 0 : index
    %c0_18 = arith.constant 0 : index
    %19 = vector.load %arg2[%c2_16, %c0_17, %c0_18] : memref<3x32x8xf32, #tpu.memory_space<vmem>>, vector<1x32x8xf32>
    %20 = vector.shape_cast %19 : vector<1x32x8xf32> to vector<32x8xf32>
    %cst_19 = arith.constant dense<0.000000e+00> : vector<32x8xf32>
    %21 = tpu.matmul %4, %20, %cst_19 {dimension_numbers = #tpu.dot_dimension_numbers<[1], [0], [0], [1], [0, 0, 1, 1], [], []>} : vector<32x32xf32>, vector<32x8xf32>, vector<32x8xf32> -> vector<32x8xf32>
    %22 = vector.shape_cast %21 : vector<32x8xf32> to vector<4x8x8xf32>
    %c2_20 = arith.constant 2 : index
    %c0_21 = arith.constant 0 : index
    %c2_22 = arith.constant 2 : index
    %c0_23 = arith.constant 0 : index
    %23 = vector.load %arg10[%c2_20, %c0_21, %c2_22, %c0_23] : memref<3x4x12x8xf32, #tpu.memory_space<vmem>>, vector<1x4x8x8xf32>
    %24 = vector.shape_cast %23 : vector<1x4x8x8xf32> to vector<4x8x8xf32>
    %25 = vector.shape_cast %22 : vector<4x8x8xf32> to vector<1x4x8x8xf32>
    tpu.vector_store %arg10[%c2_20, %c0_21, %c2_22, %c0_23], %25 {strides = array<i32>} : memref<3x4x12x8xf32, #tpu.memory_space<vmem>>, vector<1x4x8x8xf32>,
    %cst_24 = arith.constant 0.000000e+00 : f32
    %26 = vector.broadcast %cst_24 : f32 to vector<4x8x8xf32>
    %c0_25 = arith.constant 0 : index
    %c0_26 = arith.constant 0 : index
    %c0_27 = arith.constant 0 : index
    %c0_28 = arith.constant 0 : index
    %27 = vector.load %arg10[%c0_25, %c0_26, %c0_27, %c0_28] : memref<3x4x12x8xf32, #tpu.memory_space<vmem>>, vector<1x4x8x8xf32>
    %28 = vector.shape_cast %27 : vector<1x4x8x8xf32> to vector<4x8x8xf32>
    %c0_29 = arith.constant 0 : index
    %c0_30 = arith.constant 0 : index
    %c0_31 = arith.constant 0 : index
    %c0_32 = arith.constant 0 : index
    %29 = vector.load %arg3[%c0_29, %c0_30, %c0_31, %c0_32] : memref<9x4x1x8xf32, #tpu.memory_space<vmem>>, vector<1x4x1x8xf32>
    %30 = vector.shape_cast %29 : vector<1x4x1x8xf32> to vector<4x1x8xf32>
    %31 = vector.broadcast %30 : vector<4x1x8xf32> to vector<4x8x8xf32>
    %32 = arith.mulf %28, %31 : vector<4x8x8xf32>
    %33 = arith.addf %26, %32 : vector<4x8x8xf32>
    %c1_33 = arith.constant 1 : index
    %c0_34 = arith.constant 0 : index
    %c0_35 = arith.constant 0 : index
    %c0_36 = arith.constant 0 : index
    %34 = vector.load %arg10[%c1_33, %c0_34, %c0_35, %c0_36] : memref<3x4x12x8xf32, #tpu.memory_space<vmem>>, vector<1x4x8x8xf32>
    %35 = vector.shape_cast %34 : vector<1x4x8x8xf32> to vector<4x8x8xf32>
    %c1_37 = arith.constant 1 : index
    %c0_38 = arith.constant 0 : index
    %c0_39 = arith.constant 0 : index
    %c0_40 = arith.constant 0 : index
    %36 = vector.load %arg3[%c1_37, %c0_38, %c0_39, %c0_40] : memref<9x4x1x8xf32, #tpu.memory_space<vmem>>, vector<1x4x1x8xf32>
    %37 = vector.shape_cast %36 : vector<1x4x1x8xf32> to vector<4x1x8xf32>
    %38 = vector.broadcast %37 : vector<4x1x8xf32> to vector<4x8x8xf32>
    %39 = arith.mulf %35, %38 : vector<4x8x8xf32>
    %40 = arith.addf %33, %39 : vector<4x8x8xf32>
    %c2_41 = arith.constant 2 : index
    %c0_42 = arith.constant 0 : index
    %c0_43 = arith.constant 0 : index
    %c0_44 = arith.constant 0 : index
    %41 = vector.load %arg10[%c2_41, %c0_42, %c0_43, %c0_44] : memref<3x4x12x8xf32, #tpu.memory_space<vmem>>, vector<1x4x8x8xf32>
    %42 = vector.shape_cast %41 : vector<1x4x8x8xf32> to vector<4x8x8xf32>
    %c2_45 = arith.constant 2 : index
    %c0_46 = arith.constant 0 : index
    %c0_47 = arith.constant 0 : index
    %c0_48 = arith.constant 0 : index
    %43 = vector.load %arg3[%c2_45, %c0_46, %c0_47, %c0_48] : memref<9x4x1x8xf32, #tpu.memory_space<vmem>>, vector<1x4x1x8xf32>
    %44 = vector.shape_cast %43 : vector<1x4x1x8xf32> to vector<4x1x8xf32>
    %45 = vector.broadcast %44 : vector<4x1x8xf32> to vector<4x8x8xf32>
    %46 = arith.mulf %42, %45 : vector<4x8x8xf32>
    %47 = arith.addf %40, %46 : vector<4x8x8xf32>
    %c0_49 = arith.constant 0 : index
    %c0_50 = arith.constant 0 : index
    %c2_51 = arith.constant 2 : index
    %c0_52 = arith.constant 0 : index
    %48 = vector.load %arg10[%c0_49, %c0_50, %c2_51, %c0_52] : memref<3x4x12x8xf32, #tpu.memory_space<vmem>>, vector<1x4x8x8xf32>
    %49 = vector.shape_cast %48 : vector<1x4x8x8xf32> to vector<4x8x8xf32>
    %c3 = arith.constant 3 : index
    %c0_53 = arith.constant 0 : index
    %c0_54 = arith.constant 0 : index
    %c0_55 = arith.constant 0 : index
    %50 = vector.load %arg3[%c3, %c0_53, %c0_54, %c0_55] : memref<9x4x1x8xf32, #tpu.memory_space<vmem>>, vector<1x4x1x8xf32>
    %51 = vector.shape_cast %50 : vector<1x4x1x8xf32> to vector<4x1x8xf32>
    %52 = vector.broadcast %51 : vector<4x1x8xf32> to vector<4x8x8xf32>
    %53 = arith.mulf %49, %52 : vector<4x8x8xf32>
    %54 = arith.addf %47, %53 : vector<4x8x8xf32>
    %c1_56 = arith.constant 1 : index
    %c0_57 = arith.constant 0 : index
    %c2_58 = arith.constant 2 : index
    %c0_59 = arith.constant 0 : index
    %55 = vector.load %arg10[%c1_56, %c0_57, %c2_58, %c0_59] : memref<3x4x12x8xf32, #tpu.memory_space<vmem>>, vector<1x4x8x8xf32>
    %56 = vector.shape_cast %55 : vector<1x4x8x8xf32> to vector<4x8x8xf32>
    %c4 = arith.constant 4 : index
    %c0_60 = arith.constant 0 : index
    %c0_61 = arith.constant 0 : index
    %c0_62 = arith.constant 0 : index
    %57 = vector.load %arg3[%c4, %c0_60, %c0_61, %c0_62] : memref<9x4x1x8xf32, #tpu.memory_space<vmem>>, vector<1x4x1x8xf32>
    %58 = vector.shape_cast %57 : vector<1x4x1x8xf32> to vector<4x1x8xf32>
    %59 = vector.broadcast %58 : vector<4x1x8xf32> to vector<4x8x8xf32>
    %60 = arith.mulf %56, %59 : vector<4x8x8xf32>
    %61 = arith.addf %54, %60 : vector<4x8x8xf32>
    %c2_63 = arith.constant 2 : index
    %c0_64 = arith.constant 0 : index
    %c2_65 = arith.constant 2 : index
    %c0_66 = arith.constant 0 : index
    %62 = vector.load %arg10[%c2_63, %c0_64, %c2_65, %c0_66] : memref<3x4x12x8xf32, #tpu.memory_space<vmem>>, vector<1x4x8x8xf32>
    %63 = vector.shape_cast %62 : vector<1x4x8x8xf32> to vector<4x8x8xf32>
    %c5 = arith.constant 5 : index
    %c0_67 = arith.constant 0 : index
    %c0_68 = arith.constant 0 : index
    %c0_69 = arith.constant 0 : index
    %64 = vector.load %arg3[%c5, %c0_67, %c0_68, %c0_69] : memref<9x4x1x8xf32, #tpu.memory_space<vmem>>, vector<1x4x1x8xf32>
    %65 = vector.shape_cast %64 : vector<1x4x1x8xf32> to vector<4x1x8xf32>
    %66 = vector.broadcast %65 : vector<4x1x8xf32> to vector<4x8x8xf32>
    %67 = arith.mulf %63, %66 : vector<4x8x8xf32>
    %68 = arith.addf %61, %67 : vector<4x8x8xf32>
    %c0_70 = arith.constant 0 : index
    %c0_71 = arith.constant 0 : index
    %c4_72 = arith.constant 4 : index
    %c0_73 = arith.constant 0 : index
    %69 = vector.load %arg10[%c0_70, %c0_71, %c4_72, %c0_73] : memref<3x4x12x8xf32, #tpu.memory_space<vmem>>, vector<1x4x8x8xf32>
    %70 = vector.shape_cast %69 : vector<1x4x8x8xf32> to vector<4x8x8xf32>
    %c6 = arith.constant 6 : index
    %c0_74 = arith.constant 0 : index
    %c0_75 = arith.constant 0 : index
    %c0_76 = arith.constant 0 : index
    %71 = vector.load %arg3[%c6, %c0_74, %c0_75, %c0_76] : memref<9x4x1x8xf32, #tpu.memory_space<vmem>>, vector<1x4x1x8xf32>
    %72 = vector.shape_cast %71 : vector<1x4x1x8xf32> to vector<4x1x8xf32>
    %73 = vector.broadcast %72 : vector<4x1x8xf32> to vector<4x8x8xf32>
    %74 = arith.mulf %70, %73 : vector<4x8x8xf32>
    %75 = arith.addf %68, %74 : vector<4x8x8xf32>
    %c1_77 = arith.constant 1 : index
    %c0_78 = arith.constant 0 : index
    %c4_79 = arith.constant 4 : index
    %c0_80 = arith.constant 0 : index
    %76 = vector.load %arg10[%c1_77, %c0_78, %c4_79, %c0_80] : memref<3x4x12x8xf32, #tpu.memory_space<vmem>>, vector<1x4x8x8xf32>
    %77 = vector.shape_cast %76 : vector<1x4x8x8xf32> to vector<4x8x8xf32>
    %c7 = arith.constant 7 : index
    %c0_81 = arith.constant 0 : index
    %c0_82 = arith.constant 0 : index
    %c0_83 = arith.constant 0 : index
    %78 = vector.load %arg3[%c7, %c0_81, %c0_82, %c0_83] : memref<9x4x1x8xf32, #tpu.memory_space<vmem>>, vector<1x4x1x8xf32>
    %79 = vector.shape_cast %78 : vector<1x4x1x8xf32> to vector<4x1x8xf32>
    %80 = vector.broadcast %79 : vector<4x1x8xf32> to vector<4x8x8xf32>
    %81 = arith.mulf %77, %80 : vector<4x8x8xf32>
    %82 = arith.addf %75, %81 : vector<4x8x8xf32>
    %c2_84 = arith.constant 2 : index
    %c0_85 = arith.constant 0 : index
    %c4_86 = arith.constant 4 : index
    %c0_87 = arith.constant 0 : index
    %83 = vector.load %arg10[%c2_84, %c0_85, %c4_86, %c0_87] : memref<3x4x12x8xf32, #tpu.memory_space<vmem>>, vector<1x4x8x8xf32>
    %84 = vector.shape_cast %83 : vector<1x4x8x8xf32> to vector<4x8x8xf32>
    %c8 = arith.constant 8 : index
    %c0_88 = arith.constant 0 : index
    %c0_89 = arith.constant 0 : index
    %c0_90 = arith.constant 0 : index
    %85 = vector.load %arg3[%c8, %c0_88, %c0_89, %c0_90] : memref<9x4x1x8xf32, #tpu.memory_space<vmem>>, vector<1x4x1x8xf32>
    %86 = vector.shape_cast %85 : vector<1x4x1x8xf32> to vector<4x1x8xf32>
    %87 = vector.broadcast %86 : vector<4x1x8xf32> to vector<4x8x8xf32>
    %88 = arith.mulf %84, %87 : vector<4x8x8xf32>
    %89 = arith.addf %82, %88 : vector<4x8x8xf32>
    %90 = arith.index_cast %arg0 : i32 to index
    %c0_91 = arith.constant 0 : index
    %c0_92 = arith.constant 0 : index
    %c0_93 = arith.constant 0 : index
    %91 = vector.load %arg11[%90, %c0_91, %c0_92, %c0_93] : memref<2x4x8x8xf32, #tpu.memory_space<vmem>>, vector<1x4x8x8xf32>
    %92 = vector.shape_cast %91 : vector<1x4x8x8xf32> to vector<4x8x8xf32>
    %93 = vector.shape_cast %89 : vector<4x8x8xf32> to vector<1x4x8x8xf32>
    tpu.vector_store %arg11[%90, %c0_91, %c0_92, %c0_93], %93 {strides = array<i32>} : memref<2x4x8x8xf32, #tpu.memory_space<vmem>>, vector<1x4x8x8xf32>,
    %c1_i32 = arith.constant 1 : i32
    %94 = arith.cmpi eq, %arg0, %c1_i32 : i32
    %95 = arith.extui %94 : i1 to i32
    %c0_i32_94 = arith.constant 0 : i32
    %96 = arith.cmpi ne, %95, %c0_i32_94 : i32
    scf.if %96 {
      %c0_95 = arith.constant 0 : index
      %c0_96 = arith.constant 0 : index
      %c0_97 = arith.constant 0 : index
      %c0_98 = arith.constant 0 : index
      %97 = vector.load %arg11[%c0_95, %c0_96, %c0_97, %c0_98] : memref<2x4x8x8xf32, #tpu.memory_space<vmem>>, vector<2x1x8x8xf32>
      %98 = vector.shape_cast %97 : vector<2x1x8x8xf32> to vector<2x8x8xf32>
      %99 = vector.shape_cast %98 : vector<2x8x8xf32> to vector<1x2x8x8xf32>
      %cst_99 = arith.constant dense<0.000000e+00> : vector<1xf32>
      %100 = vector.multi_reduction <add>, %99, %cst_99 [1, 2, 3] : vector<1x2x8x8xf32> to vector<1xf32>
      %101 = vector.shape_cast %100 : vector<1xf32> to vector<1x1x1x1xf32>
      %102 = vector.extract %101[0, 0, 0, 0] : f32 from vector<1x1x1x1xf32>
      %cst_100 = arith.constant 7.812500e-03 : f32
      %103 = arith.mulf %102, %cst_100 : f32
      %104 = vector.broadcast %103 : f32 to vector<2x8x8xf32>
      %105 = arith.subf %98, %104 : vector<2x8x8xf32>
      %106 = arith.mulf %105, %105 : vector<2x8x8xf32>
      %107 = vector.shape_cast %106 : vector<2x8x8xf32> to vector<1x2x8x8xf32>
      %cst_101 = arith.constant dense<0.000000e+00> : vector<1xf32>
      %108 = vector.multi_reduction <add>, %107, %cst_101 [1, 2, 3] : vector<1x2x8x8xf32> to vector<1xf32>
      %109 = vector.shape_cast %108 : vector<1xf32> to vector<1x1x1x1xf32>
      %110 = vector.extract %109[0, 0, 0, 0] : f32 from vector<1x1x1x1xf32>
      %cst_102 = arith.constant 7.812500e-03 : f32
      %111 = arith.mulf %110, %cst_102 : f32
      %112 = vector.broadcast %103 : f32 to vector<2x8x8xf32>
      %113 = arith.subf %98, %112 : vector<2x8x8xf32>
      %cst_103 = arith.constant 9.99999974E-6 : f32
      %114 = arith.addf %111, %cst_103 : f32
      %115 = math.rsqrt %114 : f32
      %116 = vector.broadcast %115 : f32 to vector<2x8x8xf32>
      %117 = arith.mulf %113, %116 : vector<2x8x8xf32>
      %c0_104 = arith.constant 0 : index
      %118 = memref.load %arg5[%c0_104] : memref<4xf32, #tpu.memory_space<smem>>
      %119 = vector.broadcast %118 : f32 to vector<2x8x8xf32>
      %120 = arith.mulf %117, %119 : vector<2x8x8xf32>
      %c0_105 = arith.constant 0 : index
      %121 = memref.load %arg6[%c0_105] : memref<4xf32, #tpu.memory_space<smem>>
      %122 = vector.broadcast %121 : f32 to vector<2x8x8xf32>
      %123 = arith.addf %120, %122 : vector<2x8x8xf32>
      %cst_106 = arith.constant 0.000000e+00 : f32
      %124 = vector.broadcast %cst_106 : f32 to vector<2x8x8xf32>
      %125 = arith.maximumf %123, %124 : vector<2x8x8xf32>
      %c0_107 = arith.constant 0 : index
      %c1_108 = arith.constant 1 : index
      %c0_109 = arith.constant 0 : index
      %c0_110 = arith.constant 0 : index
      %126 = vector.load %arg11[%c0_107, %c1_108, %c0_109, %c0_110] : memref<2x4x8x8xf32, #tpu.memory_space<vmem>>, vector<2x1x8x8xf32>
      %127 = vector.shape_cast %126 : vector<2x1x8x8xf32> to vector<2x8x8xf32>
      %128 = vector.shape_cast %127 : vector<2x8x8xf32> to vector<1x2x8x8xf32>
      %cst_111 = arith.constant dense<0.000000e+00> : vector<1xf32>
      %129 = vector.multi_reduction <add>, %128, %cst_111 [1, 2, 3] : vector<1x2x8x8xf32> to vector<1xf32>
      %130 = vector.shape_cast %129 : vector<1xf32> to vector<1x1x1x1xf32>
      %131 = vector.extract %130[0, 0, 0, 0] : f32 from vector<1x1x1x1xf32>
      %cst_112 = arith.constant 7.812500e-03 : f32
      %132 = arith.mulf %131, %cst_112 : f32
      %133 = vector.broadcast %132 : f32 to vector<2x8x8xf32>
      %134 = arith.subf %127, %133 : vector<2x8x8xf32>
      %135 = arith.mulf %134, %134 : vector<2x8x8xf32>
      %136 = vector.shape_cast %135 : vector<2x8x8xf32> to vector<1x2x8x8xf32>
      %cst_113 = arith.constant dense<0.000000e+00> : vector<1xf32>
      %137 = vector.multi_reduction <add>, %136, %cst_113 [1, 2, 3] : vector<1x2x8x8xf32> to vector<1xf32>
      %138 = vector.shape_cast %137 : vector<1xf32> to vector<1x1x1x1xf32>
      %139 = vector.extract %138[0, 0, 0, 0] : f32 from vector<1x1x1x1xf32>
      %cst_114 = arith.constant 7.812500e-03 : f32
      %140 = arith.mulf %139, %cst_114 : f32
      %141 = vector.broadcast %132 : f32 to vector<2x8x8xf32>
      %142 = arith.subf %127, %141 : vector<2x8x8xf32>
      %cst_115 = arith.constant 9.99999974E-6 : f32
      %143 = arith.addf %140, %cst_115 : f32
      %144 = math.rsqrt %143 : f32
      %145 = vector.broadcast %144 : f32 to vector<2x8x8xf32>
      %146 = arith.mulf %142, %145 : vector<2x8x8xf32>
      %c1_116 = arith.constant 1 : index
      %147 = memref.load %arg5[%c1_116] : memref<4xf32, #tpu.memory_space<smem>>
      %148 = vector.broadcast %147 : f32 to vector<2x8x8xf32>
      %149 = arith.mulf %146, %148 : vector<2x8x8xf32>
      %c1_117 = arith.constant 1 : index
      %150 = memref.load %arg6[%c1_117] : memref<4xf32, #tpu.memory_space<smem>>
      %151 = vector.broadcast %150 : f32 to vector<2x8x8xf32>
      %152 = arith.addf %149, %151 : vector<2x8x8xf32>
      %cst_118 = arith.constant 0.000000e+00 : f32
      %153 = vector.broadcast %cst_118 : f32 to vector<2x8x8xf32>
      %154 = arith.maximumf %152, %153 : vector<2x8x8xf32>
      %c0_119 = arith.constant 0 : index
      %c2_120 = arith.constant 2 : index
      %c0_121 = arith.constant 0 : index
      %c0_122 = arith.constant 0 : index
      %155 = vector.load %arg11[%c0_119, %c2_120, %c0_121, %c0_122] : memref<2x4x8x8xf32, #tpu.memory_space<vmem>>, vector<2x1x8x8xf32>
      %156 = vector.shape_cast %155 : vector<2x1x8x8xf32> to vector<2x8x8xf32>
      %157 = vector.shape_cast %156 : vector<2x8x8xf32> to vector<1x2x8x8xf32>
      %cst_123 = arith.constant dense<0.000000e+00> : vector<1xf32>
      %158 = vector.multi_reduction <add>, %157, %cst_123 [1, 2, 3] : vector<1x2x8x8xf32> to vector<1xf32>
      %159 = vector.shape_cast %158 : vector<1xf32> to vector<1x1x1x1xf32>
      %160 = vector.extract %159[0, 0, 0, 0] : f32 from vector<1x1x1x1xf32>
      %cst_124 = arith.constant 7.812500e-03 : f32
      %161 = arith.mulf %160, %cst_124 : f32
      %162 = vector.broadcast %161 : f32 to vector<2x8x8xf32>
      %163 = arith.subf %156, %162 : vector<2x8x8xf32>
      %164 = arith.mulf %163, %163 : vector<2x8x8xf32>
      %165 = vector.shape_cast %164 : vector<2x8x8xf32> to vector<1x2x8x8xf32>
      %cst_125 = arith.constant dense<0.000000e+00> : vector<1xf32>
      %166 = vector.multi_reduction <add>, %165, %cst_125 [1, 2, 3] : vector<1x2x8x8xf32> to vector<1xf32>
      %167 = vector.shape_cast %166 : vector<1xf32> to vector<1x1x1x1xf32>
      %168 = vector.extract %167[0, 0, 0, 0] : f32 from vector<1x1x1x1xf32>
      %cst_126 = arith.constant 7.812500e-03 : f32
      %169 = arith.mulf %168, %cst_126 : f32
      %170 = vector.broadcast %161 : f32 to vector<2x8x8xf32>
      %171 = arith.subf %156, %170 : vector<2x8x8xf32>
      %cst_127 = arith.constant 9.99999974E-6 : f32
      %172 = arith.addf %169, %cst_127 : f32
      %173 = math.rsqrt %172 : f32
      %174 = vector.broadcast %173 : f32 to vector<2x8x8xf32>
      %175 = arith.mulf %171, %174 : vector<2x8x8xf32>
      %c2_128 = arith.constant 2 : index
      %176 = memref.load %arg5[%c2_128] : memref<4xf32, #tpu.memory_space<smem>>
      %177 = vector.broadcast %176 : f32 to vector<2x8x8xf32>
      %178 = arith.mulf %175, %177 : vector<2x8x8xf32>
      %c2_129 = arith.constant 2 : index
      %179 = memref.load %arg6[%c2_129] : memref<4xf32, #tpu.memory_space<smem>>
      %180 = vector.broadcast %179 : f32 to vector<2x8x8xf32>
      %181 = arith.addf %178, %180 : vector<2x8x8xf32>
      %cst_130 = arith.constant 0.000000e+00 : f32
      %182 = vector.broadcast %cst_130 : f32 to vector<2x8x8xf32>
      %183 = arith.maximumf %181, %182 : vector<2x8x8xf32>
      %c0_131 = arith.constant 0 : index
      %c3_132 = arith.constant 3 : index
      %c0_133 = arith.constant 0 : index
      %c0_134 = arith.constant 0 : index
      %184 = vector.load %arg11[%c0_131, %c3_132, %c0_133, %c0_134] : memref<2x4x8x8xf32, #tpu.memory_space<vmem>>, vector<2x1x8x8xf32>
      %185 = vector.shape_cast %184 : vector<2x1x8x8xf32> to vector<2x8x8xf32>
      %186 = vector.shape_cast %185 : vector<2x8x8xf32> to vector<1x2x8x8xf32>
      %cst_135 = arith.constant dense<0.000000e+00> : vector<1xf32>
      %187 = vector.multi_reduction <add>, %186, %cst_135 [1, 2, 3] : vector<1x2x8x8xf32> to vector<1xf32>
      %188 = vector.shape_cast %187 : vector<1xf32> to vector<1x1x1x1xf32>
      %189 = vector.extract %188[0, 0, 0, 0] : f32 from vector<1x1x1x1xf32>
      %cst_136 = arith.constant 7.812500e-03 : f32
      %190 = arith.mulf %189, %cst_136 : f32
      %191 = vector.broadcast %190 : f32 to vector<2x8x8xf32>
      %192 = arith.subf %185, %191 : vector<2x8x8xf32>
      %193 = arith.mulf %192, %192 : vector<2x8x8xf32>
      %194 = vector.shape_cast %193 : vector<2x8x8xf32> to vector<1x2x8x8xf32>
      %cst_137 = arith.constant dense<0.000000e+00> : vector<1xf32>
      %195 = vector.multi_reduction <add>, %194, %cst_137 [1, 2, 3] : vector<1x2x8x8xf32> to vector<1xf32>
      %196 = vector.shape_cast %195 : vector<1xf32> to vector<1x1x1x1xf32>
      %197 = vector.extract %196[0, 0, 0, 0] : f32 from vector<1x1x1x1xf32>
      %cst_138 = arith.constant 7.812500e-03 : f32
      %198 = arith.mulf %197, %cst_138 : f32
      %199 = vector.broadcast %190 : f32 to vector<2x8x8xf32>
      %200 = arith.subf %185, %199 : vector<2x8x8xf32>
      %cst_139 = arith.constant 9.99999974E-6 : f32
      %201 = arith.addf %198, %cst_139 : f32
      %202 = math.rsqrt %201 : f32
      %203 = vector.broadcast %202 : f32 to vector<2x8x8xf32>
      %204 = arith.mulf %200, %203 : vector<2x8x8xf32>
      %c3_140 = arith.constant 3 : index
      %205 = memref.load %arg5[%c3_140] : memref<4xf32, #tpu.memory_space<smem>>
      %206 = vector.broadcast %205 : f32 to vector<2x8x8xf32>
      %207 = arith.mulf %204, %206 : vector<2x8x8xf32>
      %c3_141 = arith.constant 3 : index
      %208 = memref.load %arg6[%c3_141] : memref<4xf32, #tpu.memory_space<smem>>
      %209 = vector.broadcast %208 : f32 to vector<2x8x8xf32>
      %210 = arith.addf %207, %209 : vector<2x8x8xf32>
      %cst_142 = arith.constant 0.000000e+00 : f32
      %211 = vector.broadcast %cst_142 : f32 to vector<2x8x8xf32>
      %212 = arith.maximumf %210, %211 : vector<2x8x8xf32>
      %c0_143 = arith.constant 0 : index
      %c0_144 = arith.constant 0 : index
      %213 = memref.load %arg4[%c0_143, %c0_144] : memref<8x4xf32, #tpu.memory_space<smem>>
      %214 = vector.broadcast %213 : f32 to vector<2x8x8xf32>
      %215 = arith.mulf %125, %214 : vector<2x8x8xf32>
      %c0_145 = arith.constant 0 : index
      %c1_146 = arith.constant 1 : index
      %216 = memref.load %arg4[%c0_145, %c1_146] : memref<8x4xf32, #tpu.memory_space<smem>>
      %217 = vector.broadcast %216 : f32 to vector<2x8x8xf32>
      %218 = arith.mulf %154, %217 : vector<2x8x8xf32>
      %219 = arith.addf %215, %218 : vector<2x8x8xf32>
      %c0_147 = arith.constant 0 : index
      %c2_148 = arith.constant 2 : index
      %220 = memref.load %arg4[%c0_147, %c2_148] : memref<8x4xf32, #tpu.memory_space<smem>>
      %221 = vector.broadcast %220 : f32 to vector<2x8x8xf32>
      %222 = arith.mulf %183, %221 : vector<2x8x8xf32>
      %223 = arith.addf %219, %222 : vector<2x8x8xf32>
      %c0_149 = arith.constant 0 : index
      %c3_150 = arith.constant 3 : index
      %224 = memref.load %arg4[%c0_149, %c3_150] : memref<8x4xf32, #tpu.memory_space<smem>>
      %225 = vector.broadcast %224 : f32 to vector<2x8x8xf32>
      %226 = arith.mulf %212, %225 : vector<2x8x8xf32>
      %227 = arith.addf %223, %226 : vector<2x8x8xf32>
      %228 = vector.shape_cast %227 : vector<2x8x8xf32> to vector<1x2x8x8xf32>
      %cst_151 = arith.constant dense<0.000000e+00> : vector<1xf32>
      %229 = vector.multi_reduction <add>, %228, %cst_151 [1, 2, 3] : vector<1x2x8x8xf32> to vector<1xf32>
      %230 = vector.shape_cast %229 : vector<1xf32> to vector<1x1x1x1xf32>
      %231 = vector.extract %230[0, 0, 0, 0] : f32 from vector<1x1x1x1xf32>
      %cst_152 = arith.constant 7.812500e-03 : f32
      %232 = arith.mulf %231, %cst_152 : f32
      %233 = vector.broadcast %232 : f32 to vector<2x8x8xf32>
      %234 = arith.subf %227, %233 : vector<2x8x8xf32>
      %235 = arith.mulf %234, %234 : vector<2x8x8xf32>
      %236 = vector.shape_cast %235 : vector<2x8x8xf32> to vector<1x2x8x8xf32>
      %cst_153 = arith.constant dense<0.000000e+00> : vector<1xf32>
      %237 = vector.multi_reduction <add>, %236, %cst_153 [1, 2, 3] : vector<1x2x8x8xf32> to vector<1xf32>
      %238 = vector.shape_cast %237 : vector<1xf32> to vector<1x1x1x1xf32>
      %239 = vector.extract %238[0, 0, 0, 0] : f32 from vector<1x1x1x1xf32>
      %cst_154 = arith.constant 7.812500e-03 : f32
      %240 = arith.mulf %239, %cst_154 : f32
      %241 = vector.broadcast %232 : f32 to vector<2x8x8xf32>
      %242 = arith.subf %227, %241 : vector<2x8x8xf32>
      %cst_155 = arith.constant 9.99999974E-6 : f32
      %243 = arith.addf %240, %cst_155 : f32
      %244 = math.rsqrt %243 : f32
      %245 = vector.broadcast %244 : f32 to vector<2x8x8xf32>
      %246 = arith.mulf %242, %245 : vector<2x8x8xf32>
      %c0_156 = arith.constant 0 : index
      %247 = memref.load %arg7[%c0_156] : memref<8xf32, #tpu.memory_space<smem>>
      %248 = vector.broadcast %247 : f32 to vector<2x8x8xf32>
      %249 = arith.mulf %246, %248 : vector<2x8x8xf32>
      %c0_157 = arith.constant 0 : index
      %250 = memref.load %arg8[%c0_157] : memref<8xf32, #tpu.memory_space<smem>>
      %251 = vector.broadcast %250 : f32 to vector<2x8x8xf32>
      %252 = arith.addf %249, %251 : vector<2x8x8xf32>
      %cst_158 = arith.constant 0.000000e+00 : f32
      %253 = vector.broadcast %cst_158 : f32 to vector<2x8x8xf32>
      %254 = arith.maximumf %252, %253 : vector<2x8x8xf32>
      %c0_159 = arith.constant 0 : index
      %c0_160 = arith.constant 0 : index
      %c0_161 = arith.constant 0 : index
      %c0_162 = arith.constant 0 : index
      %255 = vector.load %arg9[%c0_159, %c0_160, %c0_161, %c0_162] : memref<2x8x8x8xf32, #tpu.memory_space<vmem>>, vector<2x1x8x8xf32>
      %256 = vector.shape_cast %255 : vector<2x1x8x8xf32> to vector<2x8x8xf32>
      %257 = vector.shape_cast %254 : vector<2x8x8xf32> to vector<2x1x8x8xf32>
      tpu.vector_store %arg9[%c0_159, %c0_160, %c0_161, %c0_162], %257 {strides = array<i32>} : memref<2x8x8x8xf32, #tpu.memory_space<vmem>>, vector<2x1x8x8xf32>,
      %c1_163 = arith.constant 1 : index
      %c0_164 = arith.constant 0 : index
      %258 = memref.load %arg4[%c1_163, %c0_164] : memref<8x4xf32, #tpu.memory_space<smem>>
      %259 = vector.broadcast %258 : f32 to vector<2x8x8xf32>
      %260 = arith.mulf %125, %259 : vector<2x8x8xf32>
      %c1_165 = arith.constant 1 : index
      %c1_166 = arith.constant 1 : index
      %261 = memref.load %arg4[%c1_165, %c1_166] : memref<8x4xf32, #tpu.memory_space<smem>>
      %262 = vector.broadcast %261 : f32 to vector<2x8x8xf32>
      %263 = arith.mulf %154, %262 : vector<2x8x8xf32>
      %264 = arith.addf %260, %263 : vector<2x8x8xf32>
      %c1_167 = arith.constant 1 : index
      %c2_168 = arith.constant 2 : index
      %265 = memref.load %arg4[%c1_167, %c2_168] : memref<8x4xf32, #tpu.memory_space<smem>>
      %266 = vector.broadcast %265 : f32 to vector<2x8x8xf32>
      %267 = arith.mulf %183, %266 : vector<2x8x8xf32>
      %268 = arith.addf %264, %267 : vector<2x8x8xf32>
      %c1_169 = arith.constant 1 : index
      %c3_170 = arith.constant 3 : index
      %269 = memref.load %arg4[%c1_169, %c3_170] : memref<8x4xf32, #tpu.memory_space<smem>>
      %270 = vector.broadcast %269 : f32 to vector<2x8x8xf32>
      %271 = arith.mulf %212, %270 : vector<2x8x8xf32>
      %272 = arith.addf %268, %271 : vector<2x8x8xf32>
      %273 = vector.shape_cast %272 : vector<2x8x8xf32> to vector<1x2x8x8xf32>
      %cst_171 = arith.constant dense<0.000000e+00> : vector<1xf32>
      %274 = vector.multi_reduction <add>, %273, %cst_171 [1, 2, 3] : vector<1x2x8x8xf32> to vector<1xf32>
      %275 = vector.shape_cast %274 : vector<1xf32> to vector<1x1x1x1xf32>
      %276 = vector.extract %275[0, 0, 0, 0] : f32 from vector<1x1x1x1xf32>
      %cst_172 = arith.constant 7.812500e-03 : f32
      %277 = arith.mulf %276, %cst_172 : f32
      %278 = vector.broadcast %277 : f32 to vector<2x8x8xf32>
      %279 = arith.subf %272, %278 : vector<2x8x8xf32>
      %280 = arith.mulf %279, %279 : vector<2x8x8xf32>
      %281 = vector.shape_cast %280 : vector<2x8x8xf32> to vector<1x2x8x8xf32>
      %cst_173 = arith.constant dense<0.000000e+00> : vector<1xf32>
      %282 = vector.multi_reduction <add>, %281, %cst_173 [1, 2, 3] : vector<1x2x8x8xf32> to vector<1xf32>
      %283 = vector.shape_cast %282 : vector<1xf32> to vector<1x1x1x1xf32>
      %284 = vector.extract %283[0, 0, 0, 0] : f32 from vector<1x1x1x1xf32>
      %cst_174 = arith.constant 7.812500e-03 : f32
      %285 = arith.mulf %284, %cst_174 : f32
      %286 = vector.broadcast %277 : f32 to vector<2x8x8xf32>
      %287 = arith.subf %272, %286 : vector<2x8x8xf32>
      %cst_175 = arith.constant 9.99999974E-6 : f32
      %288 = arith.addf %285, %cst_175 : f32
      %289 = math.rsqrt %288 : f32
      %290 = vector.broadcast %289 : f32 to vector<2x8x8xf32>
      %291 = arith.mulf %287, %290 : vector<2x8x8xf32>
      %c1_176 = arith.constant 1 : index
      %292 = memref.load %arg7[%c1_176] : memref<8xf32, #tpu.memory_space<smem>>
      %293 = vector.broadcast %292 : f32 to vector<2x8x8xf32>
      %294 = arith.mulf %291, %293 : vector<2x8x8xf32>
      %c1_177 = arith.constant 1 : index
      %295 = memref.load %arg8[%c1_177] : memref<8xf32, #tpu.memory_space<smem>>
      %296 = vector.broadcast %295 : f32 to vector<2x8x8xf32>
      %297 = arith.addf %294, %296 : vector<2x8x8xf32>
      %cst_178 = arith.constant 0.000000e+00 : f32
      %298 = vector.broadcast %cst_178 : f32 to vector<2x8x8xf32>
      %299 = arith.maximumf %297, %298 : vector<2x8x8xf32>
      %c0_179 = arith.constant 0 : index
      %c1_180 = arith.constant 1 : index
      %c0_181 = arith.constant 0 : index
      %c0_182 = arith.constant 0 : index
      %300 = vector.load %arg9[%c0_179, %c1_180, %c0_181, %c0_182] : memref<2x8x8x8xf32, #tpu.memory_space<vmem>>, vector<2x1x8x8xf32>
      %301 = vector.shape_cast %300 : vector<2x1x8x8xf32> to vector<2x8x8xf32>
      %302 = vector.shape_cast %299 : vector<2x8x8xf32> to vector<2x1x8x8xf32>
      tpu.vector_store %arg9[%c0_179, %c1_180, %c0_181, %c0_182], %302 {strides = array<i32>} : memref<2x8x8x8xf32, #tpu.memory_space<vmem>>, vector<2x1x8x8xf32>,
      %c2_183 = arith.constant 2 : index
      %c0_184 = arith.constant 0 : index
      %303 = memref.load %arg4[%c2_183, %c0_184] : memref<8x4xf32, #tpu.memory_space<smem>>
      %304 = vector.broadcast %303 : f32 to vector<2x8x8xf32>
      %305 = arith.mulf %125, %304 : vector<2x8x8xf32>
      %c2_185 = arith.constant 2 : index
      %c1_186 = arith.constant 1 : index
      %306 = memref.load %arg4[%c2_185, %c1_186] : memref<8x4xf32, #tpu.memory_space<smem>>
      %307 = vector.broadcast %306 : f32 to vector<2x8x8xf32>
      %308 = arith.mulf %154, %307 : vector<2x8x8xf32>
      %309 = arith.addf %305, %308 : vector<2x8x8xf32>
      %c2_187 = arith.constant 2 : index
      %c2_188 = arith.constant 2 : index
      %310 = memref.load %arg4[%c2_187, %c2_188] : memref<8x4xf32, #tpu.memory_space<smem>>
      %311 = vector.broadcast %310 : f32 to vector<2x8x8xf32>
      %312 = arith.mulf %183, %311 : vector<2x8x8xf32>
      %313 = arith.addf %309, %312 : vector<2x8x8xf32>
      %c2_189 = arith.constant 2 : index
      %c3_190 = arith.constant 3 : index
      %314 = memref.load %arg4[%c2_189, %c3_190] : memref<8x4xf32, #tpu.memory_space<smem>>
      %315 = vector.broadcast %314 : f32 to vector<2x8x8xf32>
      %316 = arith.mulf %212, %315 : vector<2x8x8xf32>
      %317 = arith.addf %313, %316 : vector<2x8x8xf32>
      %318 = vector.shape_cast %317 : vector<2x8x8xf32> to vector<1x2x8x8xf32>
      %cst_191 = arith.constant dense<0.000000e+00> : vector<1xf32>
      %319 = vector.multi_reduction <add>, %318, %cst_191 [1, 2, 3] : vector<1x2x8x8xf32> to vector<1xf32>
      %320 = vector.shape_cast %319 : vector<1xf32> to vector<1x1x1x1xf32>
      %321 = vector.extract %320[0, 0, 0, 0] : f32 from vector<1x1x1x1xf32>
      %cst_192 = arith.constant 7.812500e-03 : f32
      %322 = arith.mulf %321, %cst_192 : f32
      %323 = vector.broadcast %322 : f32 to vector<2x8x8xf32>
      %324 = arith.subf %317, %323 : vector<2x8x8xf32>
      %325 = arith.mulf %324, %324 : vector<2x8x8xf32>
      %326 = vector.shape_cast %325 : vector<2x8x8xf32> to vector<1x2x8x8xf32>
      %cst_193 = arith.constant dense<0.000000e+00> : vector<1xf32>
      %327 = vector.multi_reduction <add>, %326, %cst_193 [1, 2, 3] : vector<1x2x8x8xf32> to vector<1xf32>
      %328 = vector.shape_cast %327 : vector<1xf32> to vector<1x1x1x1xf32>
      %329 = vector.extract %328[0, 0, 0, 0] : f32 from vector<1x1x1x1xf32>
      %cst_194 = arith.constant 7.812500e-03 : f32
      %330 = arith.mulf %329, %cst_194 : f32
      %331 = vector.broadcast %322 : f32 to vector<2x8x8xf32>
      %332 = arith.subf %317, %331 : vector<2x8x8xf32>
      %cst_195 = arith.constant 9.99999974E-6 : f32
      %333 = arith.addf %330, %cst_195 : f32
      %334 = math.rsqrt %333 : f32
      %335 = vector.broadcast %334 : f32 to vector<2x8x8xf32>
      %336 = arith.mulf %332, %335 : vector<2x8x8xf32>
      %c2_196 = arith.constant 2 : index
      %337 = memref.load %arg7[%c2_196] : memref<8xf32, #tpu.memory_space<smem>>
      %338 = vector.broadcast %337 : f32 to vector<2x8x8xf32>
      %339 = arith.mulf %336, %338 : vector<2x8x8xf32>
      %c2_197 = arith.constant 2 : index
      %340 = memref.load %arg8[%c2_197] : memref<8xf32, #tpu.memory_space<smem>>
      %341 = vector.broadcast %340 : f32 to vector<2x8x8xf32>
      %342 = arith.addf %339, %341 : vector<2x8x8xf32>
      %cst_198 = arith.constant 0.000000e+00 : f32
      %343 = vector.broadcast %cst_198 : f32 to vector<2x8x8xf32>
      %344 = arith.maximumf %342, %343 : vector<2x8x8xf32>
      %c0_199 = arith.constant 0 : index
      %c2_200 = arith.constant 2 : index
      %c0_201 = arith.constant 0 : index
      %c0_202 = arith.constant 0 : index
      %345 = vector.load %arg9[%c0_199, %c2_200, %c0_201, %c0_202] : memref<2x8x8x8xf32, #tpu.memory_space<vmem>>, vector<2x1x8x8xf32>
      %346 = vector.shape_cast %345 : vector<2x1x8x8xf32> to vector<2x8x8xf32>
      %347 = vector.shape_cast %344 : vector<2x8x8xf32> to vector<2x1x8x8xf32>
      tpu.vector_store %arg9[%c0_199, %c2_200, %c0_201, %c0_202], %347 {strides = array<i32>} : memref<2x8x8x8xf32, #tpu.memory_space<vmem>>, vector<2x1x8x8xf32>,
      %c3_203 = arith.constant 3 : index
      %c0_204 = arith.constant 0 : index
      %348 = memref.load %arg4[%c3_203, %c0_204] : memref<8x4xf32, #tpu.memory_space<smem>>
      %349 = vector.broadcast %348 : f32 to vector<2x8x8xf32>
      %350 = arith.mulf %125, %349 : vector<2x8x8xf32>
      %c3_205 = arith.constant 3 : index
      %c1_206 = arith.constant 1 : index
      %351 = memref.load %arg4[%c3_205, %c1_206] : memref<8x4xf32, #tpu.memory_space<smem>>
      %352 = vector.broadcast %351 : f32 to vector<2x8x8xf32>
      %353 = arith.mulf %154, %352 : vector<2x8x8xf32>
      %354 = arith.addf %350, %353 : vector<2x8x8xf32>
      %c3_207 = arith.constant 3 : index
      %c2_208 = arith.constant 2 : index
      %355 = memref.load %arg4[%c3_207, %c2_208] : memref<8x4xf32, #tpu.memory_space<smem>>
      %356 = vector.broadcast %355 : f32 to vector<2x8x8xf32>
      %357 = arith.mulf %183, %356 : vector<2x8x8xf32>
      %358 = arith.addf %354, %357 : vector<2x8x8xf32>
      %c3_209 = arith.constant 3 : index
      %c3_210 = arith.constant 3 : index
      %359 = memref.load %arg4[%c3_209, %c3_210] : memref<8x4xf32, #tpu.memory_space<smem>>
      %360 = vector.broadcast %359 : f32 to vector<2x8x8xf32>
      %361 = arith.mulf %212, %360 : vector<2x8x8xf32>
      %362 = arith.addf %358, %361 : vector<2x8x8xf32>
      %363 = vector.shape_cast %362 : vector<2x8x8xf32> to vector<1x2x8x8xf32>
      %cst_211 = arith.constant dense<0.000000e+00> : vector<1xf32>
      %364 = vector.multi_reduction <add>, %363, %cst_211 [1, 2, 3] : vector<1x2x8x8xf32> to vector<1xf32>
      %365 = vector.shape_cast %364 : vector<1xf32> to vector<1x1x1x1xf32>
      %366 = vector.extract %365[0, 0, 0, 0] : f32 from vector<1x1x1x1xf32>
      %cst_212 = arith.constant 7.812500e-03 : f32
      %367 = arith.mulf %366, %cst_212 : f32
      %368 = vector.broadcast %367 : f32 to vector<2x8x8xf32>
      %369 = arith.subf %362, %368 : vector<2x8x8xf32>
      %370 = arith.mulf %369, %369 : vector<2x8x8xf32>
      %371 = vector.shape_cast %370 : vector<2x8x8xf32> to vector<1x2x8x8xf32>
      %cst_213 = arith.constant dense<0.000000e+00> : vector<1xf32>
      %372 = vector.multi_reduction <add>, %371, %cst_213 [1, 2, 3] : vector<1x2x8x8xf32> to vector<1xf32>
      %373 = vector.shape_cast %372 : vector<1xf32> to vector<1x1x1x1xf32>
      %374 = vector.extract %373[0, 0, 0, 0] : f32 from vector<1x1x1x1xf32>
      %cst_214 = arith.constant 7.812500e-03 : f32
      %375 = arith.mulf %374, %cst_214 : f32
      %376 = vector.broadcast %367 : f32 to vector<2x8x8xf32>
      %377 = arith.subf %362, %376 : vector<2x8x8xf32>
      %cst_215 = arith.constant 9.99999974E-6 : f32
      %378 = arith.addf %375, %cst_215 : f32
      %379 = math.rsqrt %378 : f32
      %380 = vector.broadcast %379 : f32 to vector<2x8x8xf32>
      %381 = arith.mulf %377, %380 : vector<2x8x8xf32>
      %c3_216 = arith.constant 3 : index
      %382 = memref.load %arg7[%c3_216] : memref<8xf32, #tpu.memory_space<smem>>
      %383 = vector.broadcast %382 : f32 to vector<2x8x8xf32>
      %384 = arith.mulf %381, %383 : vector<2x8x8xf32>
      %c3_217 = arith.constant 3 : index
      %385 = memref.load %arg8[%c3_217] : memref<8xf32, #tpu.memory_space<smem>>
      %386 = vector.broadcast %385 : f32 to vector<2x8x8xf32>
      %387 = arith.addf %384, %386 : vector<2x8x8xf32>
      %cst_218 = arith.constant 0.000000e+00 : f32
      %388 = vector.broadcast %cst_218 : f32 to vector<2x8x8xf32>
      %389 = arith.maximumf %387, %388 : vector<2x8x8xf32>
      %c0_219 = arith.constant 0 : index
      %c3_220 = arith.constant 3 : index
      %c0_221 = arith.constant 0 : index
      %c0_222 = arith.constant 0 : index
      %390 = vector.load %arg9[%c0_219, %c3_220, %c0_221, %c0_222] : memref<2x8x8x8xf32, #tpu.memory_space<vmem>>, vector<2x1x8x8xf32>
      %391 = vector.shape_cast %390 : vector<2x1x8x8xf32> to vector<2x8x8xf32>
      %392 = vector.shape_cast %389 : vector<2x8x8xf32> to vector<2x1x8x8xf32>
      tpu.vector_store %arg9[%c0_219, %c3_220, %c0_221, %c0_222], %392 {strides = array<i32>} : memref<2x8x8x8xf32, #tpu.memory_space<vmem>>, vector<2x1x8x8xf32>,
      %c4_223 = arith.constant 4 : index
      %c0_224 = arith.constant 0 : index
      %393 = memref.load %arg4[%c4_223, %c0_224] : memref<8x4xf32, #tpu.memory_space<smem>>
      %394 = vector.broadcast %393 : f32 to vector<2x8x8xf32>
      %395 = arith.mulf %125, %394 : vector<2x8x8xf32>
      %c4_225 = arith.constant 4 : index
      %c1_226 = arith.constant 1 : index
      %396 = memref.load %arg4[%c4_225, %c1_226] : memref<8x4xf32, #tpu.memory_space<smem>>
      %397 = vector.broadcast %396 : f32 to vector<2x8x8xf32>
      %398 = arith.mulf %154, %397 : vector<2x8x8xf32>
      %399 = arith.addf %395, %398 : vector<2x8x8xf32>
      %c4_227 = arith.constant 4 : index
      %c2_228 = arith.constant 2 : index
      %400 = memref.load %arg4[%c4_227, %c2_228] : memref<8x4xf32, #tpu.memory_space<smem>>
      %401 = vector.broadcast %400 : f32 to vector<2x8x8xf32>
      %402 = arith.mulf %183, %401 : vector<2x8x8xf32>
      %403 = arith.addf %399, %402 : vector<2x8x8xf32>
      %c4_229 = arith.constant 4 : index
      %c3_230 = arith.constant 3 : index
      %404 = memref.load %arg4[%c4_229, %c3_230] : memref<8x4xf32, #tpu.memory_space<smem>>
      %405 = vector.broadcast %404 : f32 to vector<2x8x8xf32>
      %406 = arith.mulf %212, %405 : vector<2x8x8xf32>
      %407 = arith.addf %403, %406 : vector<2x8x8xf32>
      %408 = vector.shape_cast %407 : vector<2x8x8xf32> to vector<1x2x8x8xf32>
      %cst_231 = arith.constant dense<0.000000e+00> : vector<1xf32>
      %409 = vector.multi_reduction <add>, %408, %cst_231 [1, 2, 3] : vector<1x2x8x8xf32> to vector<1xf32>
      %410 = vector.shape_cast %409 : vector<1xf32> to vector<1x1x1x1xf32>
      %411 = vector.extract %410[0, 0, 0, 0] : f32 from vector<1x1x1x1xf32>
      %cst_232 = arith.constant 7.812500e-03 : f32
      %412 = arith.mulf %411, %cst_232 : f32
      %413 = vector.broadcast %412 : f32 to vector<2x8x8xf32>
      %414 = arith.subf %407, %413 : vector<2x8x8xf32>
      %415 = arith.mulf %414, %414 : vector<2x8x8xf32>
      %416 = vector.shape_cast %415 : vector<2x8x8xf32> to vector<1x2x8x8xf32>
      %cst_233 = arith.constant dense<0.000000e+00> : vector<1xf32>
      %417 = vector.multi_reduction <add>, %416, %cst_233 [1, 2, 3] : vector<1x2x8x8xf32> to vector<1xf32>
      %418 = vector.shape_cast %417 : vector<1xf32> to vector<1x1x1x1xf32>
      %419 = vector.extract %418[0, 0, 0, 0] : f32 from vector<1x1x1x1xf32>
      %cst_234 = arith.constant 7.812500e-03 : f32
      %420 = arith.mulf %419, %cst_234 : f32
      %421 = vector.broadcast %412 : f32 to vector<2x8x8xf32>
      %422 = arith.subf %407, %421 : vector<2x8x8xf32>
      %cst_235 = arith.constant 9.99999974E-6 : f32
      %423 = arith.addf %420, %cst_235 : f32
      %424 = math.rsqrt %423 : f32
      %425 = vector.broadcast %424 : f32 to vector<2x8x8xf32>
      %426 = arith.mulf %422, %425 : vector<2x8x8xf32>
      %c4_236 = arith.constant 4 : index
      %427 = memref.load %arg7[%c4_236] : memref<8xf32, #tpu.memory_space<smem>>
      %428 = vector.broadcast %427 : f32 to vector<2x8x8xf32>
      %429 = arith.mulf %426, %428 : vector<2x8x8xf32>
      %c4_237 = arith.constant 4 : index
      %430 = memref.load %arg8[%c4_237] : memref<8xf32, #tpu.memory_space<smem>>
      %431 = vector.broadcast %430 : f32 to vector<2x8x8xf32>
      %432 = arith.addf %429, %431 : vector<2x8x8xf32>
      %cst_238 = arith.constant 0.000000e+00 : f32
      %433 = vector.broadcast %cst_238 : f32 to vector<2x8x8xf32>
      %434 = arith.maximumf %432, %433 : vector<2x8x8xf32>
      %c0_239 = arith.constant 0 : index
      %c4_240 = arith.constant 4 : index
      %c0_241 = arith.constant 0 : index
      %c0_242 = arith.constant 0 : index
      %435 = vector.load %arg9[%c0_239, %c4_240, %c0_241, %c0_242] : memref<2x8x8x8xf32, #tpu.memory_space<vmem>>, vector<2x1x8x8xf32>
      %436 = vector.shape_cast %435 : vector<2x1x8x8xf32> to vector<2x8x8xf32>
      %437 = vector.shape_cast %434 : vector<2x8x8xf32> to vector<2x1x8x8xf32>
      tpu.vector_store %arg9[%c0_239, %c4_240, %c0_241, %c0_242], %437 {strides = array<i32>} : memref<2x8x8x8xf32, #tpu.memory_space<vmem>>, vector<2x1x8x8xf32>,
      %c5_243 = arith.constant 5 : index
      %c0_244 = arith.constant 0 : index
      %438 = memref.load %arg4[%c5_243, %c0_244] : memref<8x4xf32, #tpu.memory_space<smem>>
      %439 = vector.broadcast %438 : f32 to vector<2x8x8xf32>
      %440 = arith.mulf %125, %439 : vector<2x8x8xf32>
      %c5_245 = arith.constant 5 : index
      %c1_246 = arith.constant 1 : index
      %441 = memref.load %arg4[%c5_245, %c1_246] : memref<8x4xf32, #tpu.memory_space<smem>>
      %442 = vector.broadcast %441 : f32 to vector<2x8x8xf32>
      %443 = arith.mulf %154, %442 : vector<2x8x8xf32>
      %444 = arith.addf %440, %443 : vector<2x8x8xf32>
      %c5_247 = arith.constant 5 : index
      %c2_248 = arith.constant 2 : index
      %445 = memref.load %arg4[%c5_247, %c2_248] : memref<8x4xf32, #tpu.memory_space<smem>>
      %446 = vector.broadcast %445 : f32 to vector<2x8x8xf32>
      %447 = arith.mulf %183, %446 : vector<2x8x8xf32>
      %448 = arith.addf %444, %447 : vector<2x8x8xf32>
      %c5_249 = arith.constant 5 : index
      %c3_250 = arith.constant 3 : index
      %449 = memref.load %arg4[%c5_249, %c3_250] : memref<8x4xf32, #tpu.memory_space<smem>>
      %450 = vector.broadcast %449 : f32 to vector<2x8x8xf32>
      %451 = arith.mulf %212, %450 : vector<2x8x8xf32>
      %452 = arith.addf %448, %451 : vector<2x8x8xf32>
      %453 = vector.shape_cast %452 : vector<2x8x8xf32> to vector<1x2x8x8xf32>
      %cst_251 = arith.constant dense<0.000000e+00> : vector<1xf32>
      %454 = vector.multi_reduction <add>, %453, %cst_251 [1, 2, 3] : vector<1x2x8x8xf32> to vector<1xf32>
      %455 = vector.shape_cast %454 : vector<1xf32> to vector<1x1x1x1xf32>
      %456 = vector.extract %455[0, 0, 0, 0] : f32 from vector<1x1x1x1xf32>
      %cst_252 = arith.constant 7.812500e-03 : f32
      %457 = arith.mulf %456, %cst_252 : f32
      %458 = vector.broadcast %457 : f32 to vector<2x8x8xf32>
      %459 = arith.subf %452, %458 : vector<2x8x8xf32>
      %460 = arith.mulf %459, %459 : vector<2x8x8xf32>
      %461 = vector.shape_cast %460 : vector<2x8x8xf32> to vector<1x2x8x8xf32>
      %cst_253 = arith.constant dense<0.000000e+00> : vector<1xf32>
      %462 = vector.multi_reduction <add>, %461, %cst_253 [1, 2, 3] : vector<1x2x8x8xf32> to vector<1xf32>
      %463 = vector.shape_cast %462 : vector<1xf32> to vector<1x1x1x1xf32>
      %464 = vector.extract %463[0, 0, 0, 0] : f32 from vector<1x1x1x1xf32>
      %cst_254 = arith.constant 7.812500e-03 : f32
      %465 = arith.mulf %464, %cst_254 : f32
      %466 = vector.broadcast %457 : f32 to vector<2x8x8xf32>
      %467 = arith.subf %452, %466 : vector<2x8x8xf32>
      %cst_255 = arith.constant 9.99999974E-6 : f32
      %468 = arith.addf %465, %cst_255 : f32
      %469 = math.rsqrt %468 : f32
      %470 = vector.broadcast %469 : f32 to vector<2x8x8xf32>
      %471 = arith.mulf %467, %470 : vector<2x8x8xf32>
      %c5_256 = arith.constant 5 : index
      %472 = memref.load %arg7[%c5_256] : memref<8xf32, #tpu.memory_space<smem>>
      %473 = vector.broadcast %472 : f32 to vector<2x8x8xf32>
      %474 = arith.mulf %471, %473 : vector<2x8x8xf32>
      %c5_257 = arith.constant 5 : index
      %475 = memref.load %arg8[%c5_257] : memref<8xf32, #tpu.memory_space<smem>>
      %476 = vector.broadcast %475 : f32 to vector<2x8x8xf32>
      %477 = arith.addf %474, %476 : vector<2x8x8xf32>
      %cst_258 = arith.constant 0.000000e+00 : f32
      %478 = vector.broadcast %cst_258 : f32 to vector<2x8x8xf32>
      %479 = arith.maximumf %477, %478 : vector<2x8x8xf32>
      %c0_259 = arith.constant 0 : index
      %c5_260 = arith.constant 5 : index
      %c0_261 = arith.constant 0 : index
      %c0_262 = arith.constant 0 : index
      %480 = vector.load %arg9[%c0_259, %c5_260, %c0_261, %c0_262] : memref<2x8x8x8xf32, #tpu.memory_space<vmem>>, vector<2x1x8x8xf32>
      %481 = vector.shape_cast %480 : vector<2x1x8x8xf32> to vector<2x8x8xf32>
      %482 = vector.shape_cast %479 : vector<2x8x8xf32> to vector<2x1x8x8xf32>
      tpu.vector_store %arg9[%c0_259, %c5_260, %c0_261, %c0_262], %482 {strides = array<i32>} : memref<2x8x8x8xf32, #tpu.memory_space<vmem>>, vector<2x1x8x8xf32>,
      %c6_263 = arith.constant 6 : index
      %c0_264 = arith.constant 0 : index
      %483 = memref.load %arg4[%c6_263, %c0_264] : memref<8x4xf32, #tpu.memory_space<smem>>
      %484 = vector.broadcast %483 : f32 to vector<2x8x8xf32>
      %485 = arith.mulf %125, %484 : vector<2x8x8xf32>
      %c6_265 = arith.constant 6 : index
      %c1_266 = arith.constant 1 : index
      %486 = memref.load %arg4[%c6_265, %c1_266] : memref<8x4xf32, #tpu.memory_space<smem>>
      %487 = vector.broadcast %486 : f32 to vector<2x8x8xf32>
      %488 = arith.mulf %154, %487 : vector<2x8x8xf32>
      %489 = arith.addf %485, %488 : vector<2x8x8xf32>
      %c6_267 = arith.constant 6 : index
      %c2_268 = arith.constant 2 : index
      %490 = memref.load %arg4[%c6_267, %c2_268] : memref<8x4xf32, #tpu.memory_space<smem>>
      %491 = vector.broadcast %490 : f32 to vector<2x8x8xf32>
      %492 = arith.mulf %183, %491 : vector<2x8x8xf32>
      %493 = arith.addf %489, %492 : vector<2x8x8xf32>
      %c6_269 = arith.constant 6 : index
      %c3_270 = arith.constant 3 : index
      %494 = memref.load %arg4[%c6_269, %c3_270] : memref<8x4xf32, #tpu.memory_space<smem>>
      %495 = vector.broadcast %494 : f32 to vector<2x8x8xf32>
      %496 = arith.mulf %212, %495 : vector<2x8x8xf32>
      %497 = arith.addf %493, %496 : vector<2x8x8xf32>
      %498 = vector.shape_cast %497 : vector<2x8x8xf32> to vector<1x2x8x8xf32>
      %cst_271 = arith.constant dense<0.000000e+00> : vector<1xf32>
      %499 = vector.multi_reduction <add>, %498, %cst_271 [1, 2, 3] : vector<1x2x8x8xf32> to vector<1xf32>
      %500 = vector.shape_cast %499 : vector<1xf32> to vector<1x1x1x1xf32>
      %501 = vector.extract %500[0, 0, 0, 0] : f32 from vector<1x1x1x1xf32>
      %cst_272 = arith.constant 7.812500e-03 : f32
      %502 = arith.mulf %501, %cst_272 : f32
      %503 = vector.broadcast %502 : f32 to vector<2x8x8xf32>
      %504 = arith.subf %497, %503 : vector<2x8x8xf32>
      %505 = arith.mulf %504, %504 : vector<2x8x8xf32>
      %506 = vector.shape_cast %505 : vector<2x8x8xf32> to vector<1x2x8x8xf32>
      %cst_273 = arith.constant dense<0.000000e+00> : vector<1xf32>
      %507 = vector.multi_reduction <add>, %506, %cst_273 [1, 2, 3] : vector<1x2x8x8xf32> to vector<1xf32>
      %508 = vector.shape_cast %507 : vector<1xf32> to vector<1x1x1x1xf32>
      %509 = vector.extract %508[0, 0, 0, 0] : f32 from vector<1x1x1x1xf32>
      %cst_274 = arith.constant 7.812500e-03 : f32
      %510 = arith.mulf %509, %cst_274 : f32
      %511 = vector.broadcast %502 : f32 to vector<2x8x8xf32>
      %512 = arith.subf %497, %511 : vector<2x8x8xf32>
      %cst_275 = arith.constant 9.99999974E-6 : f32
      %513 = arith.addf %510, %cst_275 : f32
      %514 = math.rsqrt %513 : f32
      %515 = vector.broadcast %514 : f32 to vector<2x8x8xf32>
      %516 = arith.mulf %512, %515 : vector<2x8x8xf32>
      %c6_276 = arith.constant 6 : index
      %517 = memref.load %arg7[%c6_276] : memref<8xf32, #tpu.memory_space<smem>>
      %518 = vector.broadcast %517 : f32 to vector<2x8x8xf32>
      %519 = arith.mulf %516, %518 : vector<2x8x8xf32>
      %c6_277 = arith.constant 6 : index
      %520 = memref.load %arg8[%c6_277] : memref<8xf32, #tpu.memory_space<smem>>
      %521 = vector.broadcast %520 : f32 to vector<2x8x8xf32>
      %522 = arith.addf %519, %521 : vector<2x8x8xf32>
      %cst_278 = arith.constant 0.000000e+00 : f32
      %523 = vector.broadcast %cst_278 : f32 to vector<2x8x8xf32>
      %524 = arith.maximumf %522, %523 : vector<2x8x8xf32>
      %c0_279 = arith.constant 0 : index
      %c6_280 = arith.constant 6 : index
      %c0_281 = arith.constant 0 : index
      %c0_282 = arith.constant 0 : index
      %525 = vector.load %arg9[%c0_279, %c6_280, %c0_281, %c0_282] : memref<2x8x8x8xf32, #tpu.memory_space<vmem>>, vector<2x1x8x8xf32>
      %526 = vector.shape_cast %525 : vector<2x1x8x8xf32> to vector<2x8x8xf32>
      %527 = vector.shape_cast %524 : vector<2x8x8xf32> to vector<2x1x8x8xf32>
      tpu.vector_store %arg9[%c0_279, %c6_280, %c0_281, %c0_282], %527 {strides = array<i32>} : memref<2x8x8x8xf32, #tpu.memory_space<vmem>>, vector<2x1x8x8xf32>,
      %c7_283 = arith.constant 7 : index
      %c0_284 = arith.constant 0 : index
      %528 = memref.load %arg4[%c7_283, %c0_284] : memref<8x4xf32, #tpu.memory_space<smem>>
      %529 = vector.broadcast %528 : f32 to vector<2x8x8xf32>
      %530 = arith.mulf %125, %529 : vector<2x8x8xf32>
      %c7_285 = arith.constant 7 : index
      %c1_286 = arith.constant 1 : index
      %531 = memref.load %arg4[%c7_285, %c1_286] : memref<8x4xf32, #tpu.memory_space<smem>>
      %532 = vector.broadcast %531 : f32 to vector<2x8x8xf32>
      %533 = arith.mulf %154, %532 : vector<2x8x8xf32>
      %534 = arith.addf %530, %533 : vector<2x8x8xf32>
      %c7_287 = arith.constant 7 : index
      %c2_288 = arith.constant 2 : index
      %535 = memref.load %arg4[%c7_287, %c2_288] : memref<8x4xf32, #tpu.memory_space<smem>>
      %536 = vector.broadcast %535 : f32 to vector<2x8x8xf32>
      %537 = arith.mulf %183, %536 : vector<2x8x8xf32>
      %538 = arith.addf %534, %537 : vector<2x8x8xf32>
      %c7_289 = arith.constant 7 : index
      %c3_290 = arith.constant 3 : index
      %539 = memref.load %arg4[%c7_289, %c3_290] : memref<8x4xf32, #tpu.memory_space<smem>>
      %540 = vector.broadcast %539 : f32 to vector<2x8x8xf32>
      %541 = arith.mulf %212, %540 : vector<2x8x8xf32>
      %542 = arith.addf %538, %541 : vector<2x8x8xf32>
      %543 = vector.shape_cast %542 : vector<2x8x8xf32> to vector<1x2x8x8xf32>
      %cst_291 = arith.constant dense<0.000000e+00> : vector<1xf32>
      %544 = vector.multi_reduction <add>, %543, %cst_291 [1, 2, 3] : vector<1x2x8x8xf32> to vector<1xf32>
      %545 = vector.shape_cast %544 : vector<1xf32> to vector<1x1x1x1xf32>
      %546 = vector.extract %545[0, 0, 0, 0] : f32 from vector<1x1x1x1xf32>
      %cst_292 = arith.constant 7.812500e-03 : f32
      %547 = arith.mulf %546, %cst_292 : f32
      %548 = vector.broadcast %547 : f32 to vector<2x8x8xf32>
      %549 = arith.subf %542, %548 : vector<2x8x8xf32>
      %550 = arith.mulf %549, %549 : vector<2x8x8xf32>
      %551 = vector.shape_cast %550 : vector<2x8x8xf32> to vector<1x2x8x8xf32>
      %cst_293 = arith.constant dense<0.000000e+00> : vector<1xf32>
      %552 = vector.multi_reduction <add>, %551, %cst_293 [1, 2, 3] : vector<1x2x8x8xf32> to vector<1xf32>
      %553 = vector.shape_cast %552 : vector<1xf32> to vector<1x1x1x1xf32>
      %554 = vector.extract %553[0, 0, 0, 0] : f32 from vector<1x1x1x1xf32>
      %cst_294 = arith.constant 7.812500e-03 : f32
      %555 = arith.mulf %554, %cst_294 : f32
      %556 = vector.broadcast %547 : f32 to vector<2x8x8xf32>
      %557 = arith.subf %542, %556 : vector<2x8x8xf32>
      %cst_295 = arith.constant 9.99999974E-6 : f32
      %558 = arith.addf %555, %cst_295 : f32
      %559 = math.rsqrt %558 : f32
      %560 = vector.broadcast %559 : f32 to vector<2x8x8xf32>
      %561 = arith.mulf %557, %560 : vector<2x8x8xf32>
      %c7_296 = arith.constant 7 : index
      %562 = memref.load %arg7[%c7_296] : memref<8xf32, #tpu.memory_space<smem>>
      %563 = vector.broadcast %562 : f32 to vector<2x8x8xf32>
      %564 = arith.mulf %561, %563 : vector<2x8x8xf32>
      %c7_297 = arith.constant 7 : index
      %565 = memref.load %arg8[%c7_297] : memref<8xf32, #tpu.memory_space<smem>>
      %566 = vector.broadcast %565 : f32 to vector<2x8x8xf32>
      %567 = arith.addf %564, %566 : vector<2x8x8xf32>
      %cst_298 = arith.constant 0.000000e+00 : f32
      %568 = vector.broadcast %cst_298 : f32 to vector<2x8x8xf32>
      %569 = arith.maximumf %567, %568 : vector<2x8x8xf32>
      %c0_299 = arith.constant 0 : index
      %c7_300 = arith.constant 7 : index
      %c0_301 = arith.constant 0 : index
      %c0_302 = arith.constant 0 : index
      %570 = vector.load %arg9[%c0_299, %c7_300, %c0_301, %c0_302] : memref<2x8x8x8xf32, #tpu.memory_space<vmem>>, vector<2x1x8x8xf32>
      %571 = vector.shape_cast %570 : vector<2x1x8x8xf32> to vector<2x8x8xf32>
      %572 = vector.shape_cast %569 : vector<2x8x8xf32> to vector<2x1x8x8xf32>
      tpu.vector_store %arg9[%c0_299, %c7_300, %c0_301, %c0_302], %572 {strides = array<i32>} : memref<2x8x8x8xf32, #tpu.memory_space<vmem>>, vector<2x1x8x8xf32>,
    } else {
    }
    return
  }
  func.func @transform_0(%arg0: i32) -> (i32, i32, i32) {
    %c0_i32 = arith.constant 0 : i32
    %c0_i32_0 = arith.constant 0 : i32
    %c0_i32_1 = arith.constant 0 : i32
    return %arg0, %c0_i32, %c0_i32_0 : i32, i32, i32
  }
  func.func @transform_1(%arg0: i32) -> (i32, i32, i32) {
    %c0_i32 = arith.constant 0 : i32
    %c0_i32_0 = arith.constant 0 : i32
    %c0_i32_1 = arith.constant 0 : i32
    %c0_i32_2 = arith.constant 0 : i32
    return %c0_i32, %c0_i32_0, %c0_i32_1 : i32, i32, i32
  }
  func.func @transform_2(%arg0: i32) -> (i32, i32, i32, i32) {
    %c0_i32 = arith.constant 0 : i32
    %c0_i32_0 = arith.constant 0 : i32
    %c0_i32_1 = arith.constant 0 : i32
    %c0_i32_2 = arith.constant 0 : i32
    %c0_i32_3 = arith.constant 0 : i32
    return %c0_i32, %c0_i32_0, %c0_i32_1, %c0_i32_2 : i32, i32, i32, i32
  }
  func.func @transform_3(%arg0: i32) -> (i32, i32) {
    %c0_i32 = arith.constant 0 : i32
    %c0_i32_0 = arith.constant 0 : i32
    %c0_i32_1 = arith.constant 0 : i32
    return %c0_i32, %c0_i32_0 : i32, i32
  }
  func.func @transform_4(%arg0: i32) -> i32 {
    %c0_i32 = arith.constant 0 : i32
    %c0_i32_0 = arith.constant 0 : i32
    return %c0_i32 : i32
  }
  func.func @transform_5(%arg0: i32) -> i32 {
    %c0_i32 = arith.constant 0 : i32
    %c0_i32_0 = arith.constant 0 : i32
    return %c0_i32 : i32
  }
  func.func @transform_6(%arg0: i32) -> i32 {
    %c0_i32 = arith.constant 0 : i32
    %c0_i32_0 = arith.constant 0 : i32
    return %c0_i32 : i32
  }
  func.func @transform_7(%arg0: i32) -> i32 {
    %c0_i32 = arith.constant 0 : i32
    %c0_i32_0 = arith.constant 0 : i32
    return %c0_i32 : i32
  }
  func.func @transform_8(%arg0: i32) -> (i32, i32, i32, i32) {
    %c0_i32 = arith.constant 0 : i32
    %c0_i32_0 = arith.constant 0 : i32
    %c0_i32_1 = arith.constant 0 : i32
    %c0_i32_2 = arith.constant 0 : i32
    %c0_i32_3 = arith.constant 0 : i32
    return %c0_i32, %c0_i32_0, %c0_i32_1, %c0_i32_2 : i32, i32, i32, i32
  }
}

</mosaic_0001>

<llo_original>
// kernel: cdblock3_pallas.1
$region0: #{cdblock3_pallas.1}
  #allocation0 [shape = 'u32[]', space=smem, size = 0x4, offset = 0x4, fixed_abs, tag = 'smem constant byte address 0x4 - core index']
  #allocation1 [shape = 'u32[144,128]{1,0:T(1,128)}', space=vmem, size = 0x12000, scoped, tag = 'internal scratch']
  #allocation2 [shape = 'f32[3,4,12,8]{3,2,1,0:T(8,128)}', space=vmem, size = 0x18000, scoped, tag = 'scratch operand']
  #allocation3 [shape = 'f32[2,4,8,8]{3,2,1,0:T(8,128)}', space=vmem, size = 0x8000, scoped, tag = 'scratch operand']
  %s0 = inlined_call_operand.vmem [shape: f32[2,32,32], index: 0, kind: input, shape index: {}]
  %s1 = inlined_call_operand.vmem [shape: f32[3,32,8], index: 1, kind: input, shape index: {}]
  %s2 = inlined_call_operand.vmem [shape: f32[9,4,1,8], index: 2, kind: input, shape index: {}]
  %s3 = inlined_call_operand.vmem [shape: f32[8,4], index: 3, kind: input, shape index: {}]
  %s4 = inlined_call_operand.vmem [shape: f32[4], index: 4, kind: input, shape index: {}]
  %s5 = inlined_call_operand.vmem [shape: f32[4], index: 5, kind: input, shape index: {}]
  %s6 = inlined_call_operand.vmem [shape: f32[8], index: 6, kind: input, shape index: {}]
  %s7 = inlined_call_operand.vmem [shape: f32[8], index: 7, kind: input, shape index: {}]
  %s8 = inlined_call_operand.hbm [shape: f32[2,8,8,8], index: 8, kind: output, shape index: {}]
  %s9 = sld [smem:[#allocation0]]
  $region93: #{cdblock3_pallas.1} parent=0
    _
  %s11 = ssub.s32 1, %s9
  %s12 = scalar_select 0, %s11, %s9
  $region1: #{cdblock3_pallas.1} parent=0
    #allocation4 [shape = 'u8[4096]{0}', space=smem, size = 0x1000, scoped, tag = 'input window, operand 3, single buffered']
    #allocation5 [shape = 's32[2]{0}', space=sflag, size = 0x8, scoped, tag = 'scoped memory for cdblock3_pallas.1']
    #allocation6 [shape = 's32[2]{0}', space=sflag, size = 0x8, scoped, tag = 'scoped memory for cdblock3_pallas.1']
    #allocation7 [shape = 'u8[512]{0}', space=smem, size = 0x200, scoped, tag = 'input window, operand 4, single buffered']
    #allocation8 [shape = 's32[1]{0}', space=sflag, size = 0x4, scoped, tag = 'scoped memory for cdblock3_pallas.1']
    #allocation9 [shape = 'u8[512]{0}', space=smem, size = 0x200, scoped, tag = 'input window, operand 5, single buffered']
    #allocation10 [shape = 'u8[512]{0}', space=smem, size = 0x200, scoped, tag = 'input window, operand 6, single buffered']
    #allocation11 [shape = 's32[1]{0}', space=sflag, size = 0x4, scoped, tag = 'scoped memory for cdblock3_pallas.1']
    #allocation12 [shape = 'u8[512]{0}', space=smem, size = 0x200, scoped, tag = 'input window, operand 7, single buffered']
    #allocation13 [shape = 'u8[65536]{0}', space=vmem, size = 0x10000, scoped, tag = 'output window, operand 0, single buffered']
    %13 = vsyncpa [#allocation6], 0
    %14 = vsyncpa [#allocation8], 0
    %15 = vsyncpa [#allocation11], 0
    %16 = vsyncpa [#allocation5], 0
    loop: start=0, step=1, limit=4
    $region2: #{cdblock3_pallas.1} parent=1 // loop_pre_header
      _
    $region3: #{cdblock3_pallas.1} parent=1 // loop_header
      %s18 = sphi 0, %s22
      %p19 = scmp.ge.s32.totalorder %s18, 4
      %s28 = sphi 0, %s30
      %s31 = sphi 0, %s28
      %s32 = sphi 0, %s31
      %s48 = sphi 0, %s32
      %s52 = sphi 0, %s52
      %s54 = sphi 0, %s52
      %s55 = sphi 0, %s54
      %s69 = sphi 0, %s55
      %s73 = sphi 0, %s73
      %s75 = sphi 0, %s73
      %s76 = sphi 0, %s75
      %s90 = sphi 0, %s76
      %s94 = sphi 0, %s94
      %s96 = sphi 0, %s94
      %s97 = sphi 0, %s96
      %s111 = sphi 0, %s97
      %s115 = sphi 0, %s115
      %s117 = sphi 0, %s115
      %s118 = sphi 0, %s117
      %s132 = sphi 0, %s118
      %s136 = sphi 0, %s136
      %s138 = sphi 0, %s136
      %s139 = sphi 0, %s138
      %s153 = sphi 0, %s139
      %s157 = sphi 0, %s157
      %s159 = sphi 0, %s157
      %s160 = sphi 0, %s159
      %s174 = sphi 0, %s160
      %s178 = sphi 0, %s178
      %s180 = sphi 0, %s178
      %s181 = sphi 0, %s180
      %s195 = sphi 0, %s181
      %s199 = sphi 0, %s199
      %s201 = sphi 0, %s199
      %s202 = sphi 0, %s201
      %s216 = sphi 0, %s202
    $region4: #{cdblock3_pallas.1} parent=1 // loop_header_branch
      %21 = sbr.rel (%p19) target = $region8
    $region5: #{cdblock3_pallas.1} parent=1 // loop_body
      %s23 = ssub.s32 %s18, 1
      %s24 = ssub.s32 %s18, 2
      %s25 = sadd.s32 %s18, 1
      %s26 = ssub.s32 %s18, %s25
      %p27 = scmp.eq.s32.totalorder %s26, 0
      %s29 = sadd.s32 %s28, 1
      %s30 = scalar_select %p27, %s28, %s29
      %p33 = pneg %p27
      %p34 = scmp.eq.s32.totalorder %s18, 1
      %p35 = por %p33, %p34
      %p36 = scmp.ne.s32.totalorder %s28, %s31
      %p37 = scmp.eq.s32.totalorder %s18, 0
      %p38 = por %p36, %p37
      %p39 = scmp.ne.s32.totalorder %s28, %s31
      %p40 = scmp.eq.s32.totalorder %s23, 1
      %p41 = por %p39, %p40
      %p42 = scmp.ne.s32.totalorder %s31, %s32
      %p43 = scmp.eq.s32.totalorder %s23, 0
      %p44 = por %p42, %p43
      %p45 = scmp.ne.s32.totalorder %s31, %s32
      %p46 = scmp.eq.s32.totalorder %s24, 1
      %p47 = por %p45, %p46
      %p49 = scmp.ne.s32.totalorder %s32, %s48
      %p50 = scmp.eq.s32.totalorder %s24, 0
      %p51 = por %p49, %p50
      %s53 = sadd.s32 %s52, 1
      %p56 = scmp.eq.s32.totalorder %s18, 1
      %p57 = scmp.ne.s32.totalorder %s52, %s54
      %p58 = scmp.eq.s32.totalorder %s18, 0
      %p59 = por %p57, %p58
      %p60 = scmp.ne.s32.totalorder %s52, %s54
      %p61 = scmp.eq.s32.totalorder %s23, 1
      %p62 = por %p60, %p61
      %p63 = scmp.ne.s32.totalorder %s54, %s55
      %p64 = scmp.eq.s32.totalorder %s23, 0
      %p65 = por %p63, %p64
      %p66 = scmp.ne.s32.totalorder %s54, %s55
      %p67 = scmp.eq.s32.totalorder %s24, 1
      %p68 = por %p66, %p67
      %p70 = scmp.ne.s32.totalorder %s55, %s69
      %p71 = scmp.eq.s32.totalorder %s24, 0
      %p72 = por %p70, %p71
      %s74 = sadd.s32 %s73, 1
      %p77 = scmp.eq.s32.totalorder %s18, 1
      %p78 = scmp.ne.s32.totalorder %s73, %s75
      %p79 = scmp.eq.s32.totalorder %s18, 0
      %p80 = por %p78, %p79
      %p81 = scmp.ne.s32.totalorder %s73, %s75
      %p82 = scmp.eq.s32.totalorder %s23, 1
      %p83 = por %p81, %p82
      %p84 = scmp.ne.s32.totalorder %s75, %s76
      %p85 = scmp.eq.s32.totalorder %s23, 0
      %p86 = por %p84, %p85
      %p87 = scmp.ne.s32.totalorder %s75, %s76
      %p88 = scmp.eq.s32.totalorder %s24, 1
      %p89 = por %p87, %p88
      %p91 = scmp.ne.s32.totalorder %s76, %s90
      %p92 = scmp.eq.s32.totalorder %s24, 0
      %p93 = por %p91, %p92
      %s95 = sadd.s32 %s94, 1
      %p98 = scmp.eq.s32.totalorder %s18, 1
      %p99 = scmp.ne.s32.totalorder %s94, %s96
      %p100 = scmp.eq.s32.totalorder %s18, 0
      %p101 = por %p99, %p100
      %p102 = scmp.ne.s32.totalorder %s94, %s96
      %p103 = scmp.eq.s32.totalorder %s23, 1
      %p104 = por %p102, %p103
      %p105 = scmp.ne.s32.totalorder %s96, %s97
      %p106 = scmp.eq.s32.totalorder %s23, 0
      %p107 = por %p105, %p106
      %p108 = scmp.ne.s32.totalorder %s96, %s97
      %p109 = scmp.eq.s32.totalorder %s24, 1
      %p110 = por %p108, %p109
      %p112 = scmp.ne.s32.totalorder %s97, %s111
      %p113 = scmp.eq.s32.totalorder %s24, 0
      %p114 = por %p112, %p113
      %s116 = sadd.s32 %s115, 1
      %p119 = scmp.eq.s32.totalorder %s18, 1
      %p120 = scmp.ne.s32.totalorder %s115, %s117
      %p121 = scmp.eq.s32.totalorder %s18, 0
      %p122 = por %p120, %p121
      %p123 = scmp.ne.s32.totalorder %s115, %s117
      %p124 = scmp.eq.s32.totalorder %s23, 1
      %p125 = por %p123, %p124
      %p126 = scmp.ne.s32.totalorder %s117, %s118
      %p127 = scmp.eq.s32.totalorder %s23, 0
      %p128 = por %p126, %p127
      %p129 = scmp.ne.s32.totalorder %s117, %s118
      %p130 = scmp.eq.s32.totalorder %s24, 1
      %p131 = por %p129, %p130
      %p133 = scmp.ne.s32.totalorder %s118, %s132
      %p134 = scmp.eq.s32.totalorder %s24, 0
      %p135 = por %p133, %p134
      %s137 = sadd.s32 %s136, 1
      %p140 = scmp.eq.s32.totalorder %s18, 1
      %p141 = scmp.ne.s32.totalorder %s136, %s138
      %p142 = scmp.eq.s32.totalorder %s18, 0
      %p143 = por %p141, %p142
      %p144 = scmp.ne.s32.totalorder %s136, %s138
      %p145 = scmp.eq.s32.totalorder %s23, 1
      %p146 = por %p144, %p145
      %p147 = scmp.ne.s32.totalorder %s138, %s139
      %p148 = scmp.eq.s32.totalorder %s23, 0
      %p149 = por %p147, %p148
      %p150 = scmp.ne.s32.totalorder %s138, %s139
      %p151 = scmp.eq.s32.totalorder %s24, 1
      %p152 = por %p150, %p151
      %p154 = scmp.ne.s32.totalorder %s139, %s153
      %p155 = scmp.eq.s32.totalorder %s24, 0
      %p156 = por %p154, %p155
      %s158 = sadd.s32 %s157, 1
      %p161 = scmp.eq.s32.totalorder %s18, 1
      %p162 = scmp.ne.s32.totalorder %s157, %s159
      %p163 = scmp.eq.s32.totalorder %s18, 0
      %p164 = por %p162, %p163
      %p165 = scmp.ne.s32.totalorder %s157, %s159
      %p166 = scmp.eq.s32.totalorder %s23, 1
      %p167 = por %p165, %p166
      %p168 = scmp.ne.s32.totalorder %s159, %s160
      %p169 = scmp.eq.s32.totalorder %s23, 0
      %p170 = por %p168, %p169
      %p171 = scmp.ne.s32.totalorder %s159, %s160
      %p172 = scmp.eq.s32.totalorder %s24, 1
      %p173 = por %p171, %p172
      %p175 = scmp.ne.s32.totalorder %s160, %s174
      %p176 = scmp.eq.s32.totalorder %s24, 0
      %p177 = por %p175, %p176
      %s179 = sadd.s32 %s178, 1
      %p182 = scmp.eq.s32.totalorder %s18, 1
      %p183 = scmp.ne.s32.totalorder %s178, %s180
      %p184 = scmp.eq.s32.totalorder %s18, 0
      %p185 = por %p183, %p184
      %p186 = scmp.ne.s32.totalorder %s178, %s180
      %p187 = scmp.eq.s32.totalorder %s23, 1
      %p188 = por %p186, %p187
      %p189 = scmp.ne.s32.totalorder %s180, %s181
      %p190 = scmp.eq.s32.totalorder %s23, 0
      %p191 = por %p189, %p190
      %p192 = scmp.ne.s32.totalorder %s180, %s181
      %p193 = scmp.eq.s32.totalorder %s24, 1
      %p194 = por %p192, %p193
      %p196 = scmp.ne.s32.totalorder %s181, %s195
      %p197 = scmp.eq.s32.totalorder %s24, 0
      %p198 = por %p196, %p197
      %s200 = sadd.s32 %s199, 1
      %p203 = scmp.eq.s32.totalorder %s18, 1
      %p204 = scmp.ne.s32.totalorder %s199, %s201
      %p205 = scmp.eq.s32.totalorder %s18, 0
      %p206 = por %p204, %p205
      %p207 = scmp.ne.s32.totalorder %s199, %s201
      %p208 = scmp.eq.s32.totalorder %s23, 1
      %p209 = por %p207, %p208
      %p210 = scmp.ne.s32.totalorder %s201, %s202
      %p211 = scmp.eq.s32.totalorder %s23, 0
      %p212 = por %p210, %p211
      %p213 = scmp.ne.s32.totalorder %s201, %s202
      %p214 = scmp.eq.s32.totalorder %s24, 1
      %p215 = por %p213, %p214
      %p217 = scmp.ne.s32.totalorder %s202, %s216
      %p218 = scmp.eq.s32.totalorder %s24, 0
      %p219 = por %p217, %p218
      %p220 = scmp.le.s32.totalorder 1, %s18
      %p221 = scmp.lt.s32.totalorder %s18, 3
      %p222 = pnand %p220, %p221
      %p223 = pneg %p222
      // Predicated region
      $region9: #{cdblock3_pallas.1} parent=5 // pred_check
        _
      $region10: #{cdblock3_pallas.1} parent=5 // pred_check_branch
        %225 = sbr.rel (%p222) target = $region12
      $region11: #{cdblock3_pallas.1} parent=5 // pred_region
        %s226 = ssub.s32 %s18, 1
        // Predicated region
        $region13: #{cdblock3_pallas.1} parent=11 // pred_check
          %p227 = pneg %p65
        $region14: #{cdblock3_pallas.1} parent=11 // pred_check_branch
          %229 = sbr.rel (%p227) target = $region16
        $region15: #{cdblock3_pallas.1} parent=11 // pred_region
          _
        $region16: #{cdblock3_pallas.1} parent=11 // pred_fallthru
          _
        // Predicated region
        $region17: #{cdblock3_pallas.1} parent=11 // pred_check
          %p230 = pneg %p86
        $region18: #{cdblock3_pallas.1} parent=11 // pred_check_branch
          %232 = sbr.rel (%p230) target = $region20
        $region19: #{cdblock3_pallas.1} parent=11 // pred_region
          _
        $region20: #{cdblock3_pallas.1} parent=11 // pred_fallthru
          _
        // Predicated region
        $region21: #{cdblock3_pallas.1} parent=11 // pred_check
          %p233 = pneg %p107
        $region22: #{cdblock3_pallas.1} parent=11 // pred_check_branch
          %235 = sbr.rel (%p233) target = $region24
        $region23: #{cdblock3_pallas.1} parent=11 // pred_region
          %s237 = ssub.s32 128, 128
          %238 = vsyncadd [#allocation6], %s237
          %s240 = sshll.u32 %s3, 4
          %s241 = int_to_ptr.vmem [resolvable:$true] %s240
          %243 = dma.vmem_to_smem %s241, 128, [#allocation4], [#allocation6]
        $region24: #{cdblock3_pallas.1} parent=11 // pred_fallthru
          _
        // Predicated region
        $region25: #{cdblock3_pallas.1} parent=11 // pred_check
          %p244 = pneg %p128
        $region26: #{cdblock3_pallas.1} parent=11 // pred_check_branch
          %246 = sbr.rel (%p244) target = $region28
        $region27: #{cdblock3_pallas.1} parent=11 // pred_region
          %s248 = ssub.s32 16, 16
          %249 = vsyncadd [#allocation8], %s248
          %s251 = sshll.u32 %s4, 4
          %s252 = int_to_ptr.vmem [resolvable:$true] %s251
          %254 = dma.vmem_to_smem %s252, 16, [#allocation7], [#allocation8]
        $region28: #{cdblock3_pallas.1} parent=11 // pred_fallthru
          _
        // Predicated region
        $region29: #{cdblock3_pallas.1} parent=11 // pred_check
          %p255 = pneg %p149
        $region30: #{cdblock3_pallas.1} parent=11 // pred_check_branch
          %257 = sbr.rel (%p255) target = $region32
        $region31: #{cdblock3_pallas.1} parent=11 // pred_region
          %s259 = ssub.s32 16, 16
          %260 = vsyncadd [#allocation8], %s259
          %s262 = sshll.u32 %s5, 4
          %s263 = int_to_ptr.vmem [resolvable:$true] %s262
          %265 = dma.vmem_to_smem %s263, 16, [#allocation9], [#allocation8]
        $region32: #{cdblock3_pallas.1} parent=11 // pred_fallthru
          _
        // Predicated region
        $region33: #{cdblock3_pallas.1} parent=11 // pred_check
          %p266 = pneg %p170
        $region34: #{cdblock3_pallas.1} parent=11 // pred_check_branch
          %268 = sbr.rel (%p266) target = $region36
        $region35: #{cdblock3_pallas.1} parent=11 // pred_region
          %s270 = ssub.s32 16, 16
          %271 = vsyncadd [#allocation11], %s270
          %s273 = sshll.u32 %s6, 4
          %s274 = int_to_ptr.vmem [resolvable:$true] %s273
          %276 = dma.vmem_to_smem %s274, 16, [#allocation10], [#allocation11]
        $region36: #{cdblock3_pallas.1} parent=11 // pred_fallthru
          _
        // Predicated region
        $region37: #{cdblock3_pallas.1} parent=11 // pred_check
          %p277 = pneg %p191
        $region38: #{cdblock3_pallas.1} parent=11 // pred_check_branch
          %279 = sbr.rel (%p277) target = $region40
        $region39: #{cdblock3_pallas.1} parent=11 // pred_region
          %s281 = ssub.s32 16, 16
          %282 = vsyncadd [#allocation11], %s281
          %s284 = sshll.u32 %s7, 4
          %s285 = int_to_ptr.vmem [resolvable:$true] %s284
          %287 = dma.vmem_to_smem %s285, 16, [#allocation12], [#allocation11]
        $region40: #{cdblock3_pallas.1} parent=11 // pred_fallthru
          _
      $region12: #{cdblock3_pallas.1} parent=5 // pred_fallthru
        _
      %p288 = scmp.lt.s32.totalorder %s18, 2
      // Predicated region
      $region41: #{cdblock3_pallas.1} parent=5 // pred_check
        %p289 = pneg %p288
      $region42: #{cdblock3_pallas.1} parent=5 // pred_check_branch
        %291 = sbr.rel (%p289) target = $region44
      $region43: #{cdblock3_pallas.1} parent=5 // pred_region
        // Predicated region
        $region45: #{cdblock3_pallas.1} parent=43 // pred_check
          %p292 = pneg %p38
        $region46: #{cdblock3_pallas.1} parent=43 // pred_check_branch
          %294 = sbr.rel (%p292) target = $region48
        $region47: #{cdblock3_pallas.1} parent=43 // pred_region
          %p295 = scmp.lt.s32.totalorder %s18, 1
          %s296 = scalar_select %p295, %s18, 1
          %s297 = smul.addr %s296, 4
          %s298 = smul.addr %s297, 8
          %s299 = scalar_lea.vmem %s0, %s298
        $region48: #{cdblock3_pallas.1} parent=43 // pred_fallthru
          _
      $region44: #{cdblock3_pallas.1} parent=5 // pred_fallthru
        _
      %p300 = scmp.le.s32.totalorder 1, %s18
      %p301 = scmp.lt.s32.totalorder %s18, 3
      %p302 = pnand %p300, %p301
      %p303 = pneg %p302
      // Predicated region
      $region49: #{cdblock3_pallas.1} parent=5 // pred_check
        _
      $region50: #{cdblock3_pallas.1} parent=5 // pred_check_branch
        %305 = sbr.rel (%p302) target = $region52
      $region51: #{cdblock3_pallas.1} parent=5 // pred_region
        %s306 = ssub.s32 %s18, 1
        // Predicated region
        $region53: #{cdblock3_pallas.1} parent=51 // pred_check
          %p307 = pneg %p107
        $region54: #{cdblock3_pallas.1} parent=51 // pred_check_branch
          %309 = sbr.rel (%p307) target = $region56
        $region55: #{cdblock3_pallas.1} parent=51 // pred_region
          %310 = dma.done [#allocation6], 128
        $region56: #{cdblock3_pallas.1} parent=51 // pred_fallthru
          _
        // Predicated region
        $region57: #{cdblock3_pallas.1} parent=51 // pred_check
          %p311 = pneg %p128
        $region58: #{cdblock3_pallas.1} parent=51 // pred_check_branch
          %313 = sbr.rel (%p311) target = $region60
        $region59: #{cdblock3_pallas.1} parent=51 // pred_region
          %314 = dma.done [#allocation8], 16
        $region60: #{cdblock3_pallas.1} parent=51 // pred_fallthru
          _
        // Predicated region
        $region61: #{cdblock3_pallas.1} parent=51 // pred_check
          %p315 = pneg %p149
        $region62: #{cdblock3_pallas.1} parent=51 // pred_check_branch
          %317 = sbr.rel (%p315) target = $region64
        $region63: #{cdblock3_pallas.1} parent=51 // pred_region
          %318 = dma.done [#allocation8], 16
        $region64: #{cdblock3_pallas.1} parent=51 // pred_fallthru
          _
        // Predicated region
        $region65: #{cdblock3_pallas.1} parent=51 // pred_check
          %p319 = pneg %p170
        $region66: #{cdblock3_pallas.1} parent=51 // pred_check_branch
          %321 = sbr.rel (%p319) target = $region68
        $region67: #{cdblock3_pallas.1} parent=51 // pred_region
          %322 = dma.done [#allocation11], 16
        $region68: #{cdblock3_pallas.1} parent=51 // pred_fallthru
          _
        // Predicated region
        $region69: #{cdblock3_pallas.1} parent=51 // pred_check
          %p323 = pneg %p191
        $region70: #{cdblock3_pallas.1} parent=51 // pred_check_branch
          %325 = sbr.rel (%p323) target = $region72
        $region71: #{cdblock3_pallas.1} parent=51 // pred_region
          %326 = dma.done [#allocation11], 16
        $region72: #{cdblock3_pallas.1} parent=51 // pred_fallthru
          _
        %327 = sfence
        %p328 = scmp.lt.s32.totalorder %s23, 1
        %s329 = scalar_select %p328, %s23, 1
        %s330 = smul.addr %s329, 4
        %s331 = smul.addr %s330, 8
        %s332 = scalar_lea.vmem %s0, %s331
        %p333 = pneg %p44
        %p334 = pneg %p41
        %p335 = pneg %p65
        %p336 = pneg %p62
        %p337 = pneg %p86
        %p338 = pneg %p83
        %p339 = pneg %p107
        %p340 = pneg %p104
        %p341 = pneg %p128
        %p342 = pneg %p125
        %p343 = pneg %p149
        %p344 = pneg %p146
        %p345 = pneg %p170
        %p346 = pneg %p167
        %p347 = pneg %p191
        %p348 = pneg %p188
        %p349 = pneg %p212
        %p350 = pneg %p209
        %p351 = scmp.lt.s32.totalorder %s23, 1
        %s352 = scalar_select %p351, %s23, 1
        %s353 = smul.addr %s352, 4
        %s354 = smul.addr %s353, 8
        %s355 = scalar_lea.vmem %s0, %s354
        %p356 = scmp.eq.s32.totalorder %s23, 0
        // Predicated region
        $region73: #{cdblock3_pallas.1} parent=51 // pred_check
          %p357 = pneg %p356
        $region74: #{cdblock3_pallas.1} parent=51 // pred_check_branch
          %359 = sbr.rel (%p357) target = $region76
        $region75: #{cdblock3_pallas.1} parent=51 // pred_region
          %vm360 = vcmask 64512
          %361 = vst.msk [vmem:[#allocation2] sm:$0xff] %vm360, 0.0
          %vm362 = vcmask 60416
          %363 = vst.msk [vmem:[#allocation2 + $0x8] sm:$0xf] %vm362, 0.0
          %364 = vst.msk [vmem:[#allocation2 + $0x10] sm:$0xff] %vm360, 0.0
          %365 = vst.msk [vmem:[#allocation2 + $0x18] sm:$0xf] %vm362, 0.0
          %366 = vst.msk [vmem:[#allocation2 + $0x20] sm:$0xff] %vm360, 0.0
          %367 = vst.msk [vmem:[#allocation2 + $0x28] sm:$0xf] %vm362, 0.0
          %368 = vst.msk [vmem:[#allocation2 + $0x30] sm:$0xff] %vm360, 0.0
          %369 = vst.msk [vmem:[#allocation2 + $0x38] sm:$0xf] %vm362, 0.0
          %370 = vst.msk [vmem:[#allocation2 + $0x40] sm:$0xff] %vm360, 0.0
          %371 = vst.msk [vmem:[#allocation2 + $0x48] sm:$0xf] %vm362, 0.0
          %372 = vst.msk [vmem:[#allocation2 + $0x50] sm:$0xff] %vm360, 0.0
          %373 = vst.msk [vmem:[#allocation2 + $0x58] sm:$0xf] %vm362, 0.0
          %374 = vst.msk [vmem:[#allocation2 + $0x60] sm:$0xff] %vm360, 0.0
          %375 = vst.msk [vmem:[#allocation2 + $0x68] sm:$0xf] %vm362, 0.0
          %376 = vst.msk [vmem:[#allocation2 + $0x70] sm:$0xff] %vm360, 0.0
          %377 = vst.msk [vmem:[#allocation2 + $0x78] sm:$0xf] %vm362, 0.0
          %378 = vst.msk [vmem:[#allocation2 + $0x80] sm:$0xff] %vm360, 0.0
          %379 = vst.msk [vmem:[#allocation2 + $0x88] sm:$0xf] %vm362, 0.0
          %380 = vst.msk [vmem:[#allocation2 + $0x90] sm:$0xff] %vm360, 0.0
          %381 = vst.msk [vmem:[#allocation2 + $0x98] sm:$0xf] %vm362, 0.0
          %382 = vst.msk [vmem:[#allocation2 + $0xa0] sm:$0xff] %vm360, 0.0
          %383 = vst.msk [vmem:[#allocation2 + $0xa8] sm:$0xf] %vm362, 0.0
          %384 = vst.msk [vmem:[#allocation2 + $0xb0] sm:$0xff] %vm360, 0.0
          %385 = vst.msk [vmem:[#allocation2 + $0xb8] sm:$0xf] %vm362, 0.0
        $region76: #{cdblock3_pallas.1} parent=51 // pred_fallthru
          _
        %v386 = vld [vmem:[%s355] sm:$0xff]
        %v387 = vld [vmem:[%s355 + $0x8] sm:$0xff]
        %v388 = vld [vmem:[%s355 + $0x10] sm:$0xff]
        %v389 = vld [vmem:[%s355 + $0x18] sm:$0xff]
        %v390 = vld [vmem:[%s1] sm:$0xff]
        %v391 = vld [vmem:[%s1 + $0x8] sm:$0xff]
        %v392 = vld [vmem:[%s1 + $0x10] sm:$0xff]
        %v393 = vld [vmem:[%s1 + $0x18] sm:$0xff]
        %vm394 = vcmask 261120
        %v396 = vsel %vm394, %v386, 0
        %v399 = vsel %vm394, %v387, 0
        %v402 = vsel %vm394, %v388, 0
        %v405 = vsel %vm394, %v389, 0
        %407 = vmatprep.subr.mxu0 0.0
        %408 = vmatpush1.msra.mxu0 %v390
        %409 = vmatprep.subr.mxu0 0.0
        %410 = vmatpush1.msra.mxu0 %v391
        %411 = vmatprep.subr.mxu0 0.0
        %412 = vmatpush1.msra.mxu0 %v392
        %413 = vmatprep.subr.mxu0 0.0
        %414 = vmatpush1.msra.mxu0 %v393
        %415 = vmatprep.subr.mxu0 0.0
        %416 = vmatpush1.msra.mxu0 0.0
        %417 = vmatprep.subr.mxu0 0.0
        %418 = vmatpush1.msra.mxu0 0.0
        %419 = vmatprep.subr.mxu0 0.0
        %420 = vmatpush1.msra.mxu0 0.0
        %421 = vmatprep.subr.mxu0 0.0
        %422 = vmatpush1.msra.mxu0 0.0
        %423 = vmatprep.subr.mxu0 0.0
        %424 = vmatpush1.msra.mxu0 0.0
        %425 = vmatprep.subr.mxu0 0.0
        %426 = vmatpush1.msra.mxu0 0.0
        %427 = vmatprep.subr.mxu0 0.0
        %428 = vmatpush1.msra.mxu0 0.0
        %429 = vmatprep.subr.mxu0 0.0
        %430 = vmatpush1.msra.mxu0 0.0
        %431 = vmatprep.subr.mxu0 0.0
        %432 = vmatpush1.msra.mxu0 0.0
        %433 = vmatprep.subr.mxu0 0.0
        %434 = vmatpush1.msra.mxu0 0.0
        %435 = vmatprep.subr.mxu0 0.0
        %436 = vmatpush1.msra.mxu0 0.0
        %437 = vmatprep.subr.mxu0 0.0
        %438 = vmatpush1.msra.mxu0 0.0
        %439 = vmatprep.subr.mxu0 0.0
        %440 = vmatpush1.msra.mxu0 0.0
        %441 = vmatprep.subr.mxu0 0.0
        %442 = vmatpush1.msra.mxu0 0.0
        %443 = vmatprep.subr.mxu0 0.0
        %444 = vmatpush1.msra.mxu0 0.0
        %445 = vmatprep.subr.mxu0 0.0
        %446 = vmatpush1.msra.mxu0 0.0
        %447 = vmatprep.subr.mxu0 0.0
        %448 = vmatpush1.msra.mxu0 0.0
        %449 = vmatprep.subr.mxu0 0.0
        %450 = vmatpush1.msra.mxu0 0.0
        %451 = vmatprep.subr.mxu0 0.0
        %452 = vmatpush1.msra.mxu0 0.0
        %453 = vmatprep.subr.mxu0 0.0
        %454 = vmatpush1.msra.mxu0 0.0
        %455 = vmatprep.subr.mxu0 0.0
        %456 = vmatpush1.msra.mxu0 0.0
        %457 = vmatprep.subr.mxu0 0.0
        %458 = vmatpush1.msra.mxu0 0.0
        %459 = vmatprep.subr.mxu0 0.0
        %460 = vmatpush1.msra.mxu0 0.0
        %461 = vmatprep.subr.mxu0 0.0
        %462 = vmatpush1.msra.mxu0 0.0
        %463 = vmatprep.subr.mxu0 0.0
        %464 = vmatpush1.msra.mxu0 0.0
        %465 = vmatprep.subr.mxu0 0.0
        %466 = vmatpush1.msra.mxu0 0.0
        %467 = vmatprep.subr.mxu0 0.0
        %468 = vmatpush1.msra.mxu0 0.0
        %469 = vmatprep.subr.mxu0 0.0
        %470 = vmatpush1.msra.mxu0 0.0
        %471 = vmatprep.mubr.f32.mxu0 0.0
        %472 = vmatmul.mubr.f32.gmra.mrb[0].mxu0 %v396
        %v473 = vpop.f32.mrb[0].mxu0
        %v474 = vadd.f32 0.0, %v473
        %v475 = vpop.f32.mrb[0].mxu0
        %476 = vmatprep.mubr.f32.mxu0 0.0
        %477 = vmatmul.mubr.f32.gmra.mrb[0].mxu0 %v399
        %v478 = vpop.f32.mrb[0].mxu0
        %v479 = vadd.f32 0.0, %v478
        %v480 = vpop.f32.mrb[0].mxu0
        %481 = vmatprep.mubr.f32.mxu0 0.0
        %482 = vmatmul.mubr.f32.gmra.mrb[0].mxu0 %v402
        %v483 = vpop.f32.mrb[0].mxu0
        %v484 = vadd.f32 0.0, %v483
        %v485 = vpop.f32.mrb[0].mxu0
        %486 = vmatprep.mubr.f32.mxu0 0.0
        %487 = vmatmul.mubr.f32.gmra.mrb[0].mxu0 %v405
        %v488 = vpop.f32.mrb[0].mxu0
        %v489 = vadd.f32 0.0, %v488
        %v490 = vpop.f32.mrb[0].mxu0
        %491 = vdwg.mxu0
        %vm492 = vcmask 64512
        %493 = vst.msk [vmem:[#allocation2 + $0x2] sm:$0xff] %vm492, %v474
        %494 = vst.msk [vmem:[#allocation2 + $0x12] sm:$0xff] %vm492, %v479
        %495 = vst.msk [vmem:[#allocation2 + $0x22] sm:$0xff] %vm492, %v484
        %496 = vst.msk [vmem:[#allocation2 + $0x32] sm:$0xff] %vm492, %v489
        %s497 = scalar_lea.vmem %s1, 32
        %v498 = vld [vmem:[%s497] sm:$0xff]
        %v499 = vld [vmem:[%s497 + $0x8] sm:$0xff]
        %v500 = vld [vmem:[%s497 + $0x10] sm:$0xff]
        %v501 = vld [vmem:[%s497 + $0x18] sm:$0xff]
        %502 = vmatprep.subr.mxu0 0.0
        %503 = vmatpush1.msra.mxu0 %v498
        %504 = vmatprep.subr.mxu0 0.0
        %505 = vmatpush1.msra.mxu0 %v499
        %506 = vmatprep.subr.mxu0 0.0
        %507 = vmatpush1.msra.mxu0 %v500
        %508 = vmatprep.subr.mxu0 0.0
        %509 = vmatpush1.msra.mxu0 %v501
        %510 = vmatprep.subr.mxu0 0.0
        %511 = vmatpush1.msra.mxu0 0.0
        %512 = vmatprep.subr.mxu0 0.0
        %513 = vmatpush1.msra.mxu0 0.0
        %514 = vmatprep.subr.mxu0 0.0
        %515 = vmatpush1.msra.mxu0 0.0
        %516 = vmatprep.subr.mxu0 0.0
        %517 = vmatpush1.msra.mxu0 0.0
        %518 = vmatprep.subr.mxu0 0.0
        %519 = vmatpush1.msra.mxu0 0.0
        %520 = vmatprep.subr.mxu0 0.0
        %521 = vmatpush1.msra.mxu0 0.0
        %522 = vmatprep.subr.mxu0 0.0
        %523 = vmatpush1.msra.mxu0 0.0
        %524 = vmatprep.subr.mxu0 0.0
        %525 = vmatpush1.msra.mxu0 0.0
        %526 = vmatprep.subr.mxu0 0.0
        %527 = vmatpush1.msra.mxu0 0.0
        %528 = vmatprep.subr.mxu0 0.0
        %529 = vmatpush1.msra.mxu0 0.0
        %530 = vmatprep.subr.mxu0 0.0
        %531 = vmatpush1.msra.mxu0 0.0
        %532 = vmatprep.subr.mxu0 0.0
        %533 = vmatpush1.msra.mxu0 0.0
        %534 = vmatprep.subr.mxu0 0.0
        %535 = vmatpush1.msra.mxu0 0.0
        %536 = vmatprep.subr.mxu0 0.0
        %537 = vmatpush1.msra.mxu0 0.0
        %538 = vmatprep.subr.mxu0 0.0
        %539 = vmatpush1.msra.mxu0 0.0
        %540 = vmatprep.subr.mxu0 0.0
        %541 = vmatpush1.msra.mxu0 0.0
        %542 = vmatprep.subr.mxu0 0.0
        %543 = vmatpush1.msra.mxu0 0.0
        %544 = vmatprep.subr.mxu0 0.0
        %545 = vmatpush1.msra.mxu0 0.0
        %546 = vmatprep.subr.mxu0 0.0
        %547 = vmatpush1.msra.mxu0 0.0
        %548 = vmatprep.subr.mxu0 0.0
        %549 = vmatpush1.msra.mxu0 0.0
        %550 = vmatprep.subr.mxu0 0.0
        %551 = vmatpush1.msra.mxu0 0.0
        %552 = vmatprep.subr.mxu0 0.0
        %553 = vmatpush1.msra.mxu0 0.0
        %554 = vmatprep.subr.mxu0 0.0
        %555 = vmatpush1.msra.mxu0 0.0
        %556 = vmatprep.subr.mxu0 0.0
        %557 = vmatpush1.msra.mxu0 0.0
        %558 = vmatprep.subr.mxu0 0.0
        %559 = vmatpush1.msra.mxu0 0.0
        %560 = vmatprep.subr.mxu0 0.0
        %561 = vmatpush1.msra.mxu0 0.0
        %562 = vmatprep.subr.mxu0 0.0
        %563 = vmatpush1.msra.mxu0 0.0
        %564 = vmatprep.subr.mxu0 0.0
        %565 = vmatpush1.msra.mxu0 0.0
        %566 = vmatprep.mubr.f32.mxu0 0.0
        %567 = vmatmul.mubr.f32.gmra.mrb[0].mxu0 %v396
        %v568 = vpop.f32.mrb[0].mxu0
        %v569 = vadd.f32 0.0, %v568
        %v570 = vpop.f32.mrb[0].mxu0
        %571 = vmatprep.mubr.f32.mxu0 0.0
        %572 = vmatmul.mubr.f32.gmra.mrb[0].mxu0 %v399
        %v573 = vpop.f32.mrb[0].mxu0
        %v574 = vadd.f32 0.0, %v573
        %v575 = vpop.f32.mrb[0].mxu0
        %576 = vmatprep.mubr.f32.mxu0 0.0
        %577 = vmatmul.mubr.f32.gmra.mrb[0].mxu0 %v402
        %v578 = vpop.f32.mrb[0].mxu0
        %v579 = vadd.f32 0.0, %v578
        %v580 = vpop.f32.mrb[0].mxu0
        %581 = vmatprep.mubr.f32.mxu0 0.0
        %582 = vmatmul.mubr.f32.gmra.mrb[0].mxu0 %v405
        %v583 = vpop.f32.mrb[0].mxu0
        %v584 = vadd.f32 0.0, %v583
        %v585 = vpop.f32.mrb[0].mxu0
        %586 = vdwg.mxu0
        %s587 = scalar_lea.vmem [#allocation2], 64
        %588 = vst.msk [vmem:[%s587 + $0x2] sm:$0xff] %vm492, %v569
        %589 = vst.msk [vmem:[%s587 + $0x12] sm:$0xff] %vm492, %v574
        %590 = vst.msk [vmem:[%s587 + $0x22] sm:$0xff] %vm492, %v579
        %591 = vst.msk [vmem:[%s587 + $0x32] sm:$0xff] %vm492, %v584
        %s592 = scalar_lea.vmem %s1, 64
        %v593 = vld [vmem:[%s592] sm:$0xff]
        %v594 = vld [vmem:[%s592 + $0x8] sm:$0xff]
        %v595 = vld [vmem:[%s592 + $0x10] sm:$0xff]
        %v596 = vld [vmem:[%s592 + $0x18] sm:$0xff]
        %597 = vmatprep.subr.mxu0 0.0
        %598 = vmatpush1.msra.mxu0 %v593
        %599 = vmatprep.subr.mxu0 0.0
        %600 = vmatpush1.msra.mxu0 %v594
        %601 = vmatprep.subr.mxu0 0.0
        %602 = vmatpush1.msra.mxu0 %v595
        %603 = vmatprep.subr.mxu0 0.0
        %604 = vmatpush1.msra.mxu0 %v596
        %605 = vmatprep.subr.mxu0 0.0
        %606 = vmatpush1.msra.mxu0 0.0
        %607 = vmatprep.subr.mxu0 0.0
        %608 = vmatpush1.msra.mxu0 0.0
        %609 = vmatprep.subr.mxu0 0.0
        %610 = vmatpush1.msra.mxu0 0.0
        %611 = vmatprep.subr.mxu0 0.0
        %612 = vmatpush1.msra.mxu0 0.0
        %613 = vmatprep.subr.mxu0 0.0
        %614 = vmatpush1.msra.mxu0 0.0
        %615 = vmatprep.subr.mxu0 0.0
        %616 = vmatpush1.msra.mxu0 0.0
        %617 = vmatprep.subr.mxu0 0.0
        %618 = vmatpush1.msra.mxu0 0.0
        %619 = vmatprep.subr.mxu0 0.0
        %620 = vmatpush1.msra.mxu0 0.0
        %621 = vmatprep.subr.mxu0 0.0
        %622 = vmatpush1.msra.mxu0 0.0
        %623 = vmatprep.subr.mxu0 0.0
        %624 = vmatpush1.msra.mxu0 0.0
        %625 = vmatprep.subr.mxu0 0.0
        %626 = vmatpush1.msra.mxu0 0.0
        %627 = vmatprep.subr.mxu0 0.0
        %628 = vmatpush1.msra.mxu0 0.0
        %629 = vmatprep.subr.mxu0 0.0
        %630 = vmatpush1.msra.mxu0 0.0
        %631 = vmatprep.subr.mxu0 0.0
        %632 = vmatpush1.msra.mxu0 0.0
        %633 = vmatprep.subr.mxu0 0.0
        %634 = vmatpush1.msra.mxu0 0.0
        %635 = vmatprep.subr.mxu0 0.0
        %636 = vmatpush1.msra.mxu0 0.0
        %637 = vmatprep.subr.mxu0 0.0
        %638 = vmatpush1.msra.mxu0 0.0
        %639 = vmatprep.subr.mxu0 0.0
        %640 = vmatpush1.msra.mxu0 0.0
        %641 = vmatprep.subr.mxu0 0.0
        %642 = vmatpush1.msra.mxu0 0.0
        %643 = vmatprep.subr.mxu0 0.0
        %644 = vmatpush1.msra.mxu0 0.0
        %645 = vmatprep.subr.mxu0 0.0
        %646 = vmatpush1.msra.mxu0 0.0
        %647 = vmatprep.subr.mxu0 0.0
        %648 = vmatpush1.msra.mxu0 0.0
        %649 = vmatprep.subr.mxu0 0.0
        %650 = vmatpush1.msra.mxu0 0.0
        %651 = vmatprep.subr.mxu0 0.0
        %652 = vmatpush1.msra.mxu0 0.0
        %653 = vmatprep.subr.mxu0 0.0
        %654 = vmatpush1.msra.mxu0 0.0
        %655 = vmatprep.subr.mxu0 0.0
        %656 = vmatpush1.msra.mxu0 0.0
        %657 = vmatprep.subr.mxu0 0.0
        %658 = vmatpush1.msra.mxu0 0.0
        %659 = vmatprep.subr.mxu0 0.0
        %660 = vmatpush1.msra.mxu0 0.0
        %661 = vmatprep.mubr.f32.mxu0 0.0
        %662 = vmatmul.mubr.f32.gmra.mrb[0].mxu0 %v396
        %v663 = vpop.f32.mrb[0].mxu0
        %v664 = vadd.f32 0.0, %v663
        %v665 = vpop.f32.mrb[0].mxu0
        %666 = vmatprep.mubr.f32.mxu0 0.0
        %667 = vmatmul.mubr.f32.gmra.mrb[0].mxu0 %v399
        %v668 = vpop.f32.mrb[0].mxu0
        %v669 = vadd.f32 0.0, %v668
        %v670 = vpop.f32.mrb[0].mxu0
        %671 = vmatprep.mubr.f32.mxu0 0.0
        %672 = vmatmul.mubr.f32.gmra.mrb[0].mxu0 %v402
        %v673 = vpop.f32.mrb[0].mxu0
        %v674 = vadd.f32 0.0, %v673
        %v675 = vpop.f32.mrb[0].mxu0
        %676 = vmatprep.mubr.f32.mxu0 0.0
        %677 = vmatmul.mubr.f32.gmra.mrb[0].mxu0 %v405
        %v678 = vpop.f32.mrb[0].mxu0
        %v679 = vadd.f32 0.0, %v678
        %v680 = vpop.f32.mrb[0].mxu0
        %681 = vdwg.mxu0
        %s682 = scalar_lea.vmem [#allocation2], 128
        %683 = vst.msk [vmem:[%s682 + $0x2] sm:$0xff] %vm492, %v664
        %684 = vst.msk [vmem:[%s682 + $0x12] sm:$0xff] %vm492, %v669
        %685 = vst.msk [vmem:[%s682 + $0x22] sm:$0xff] %vm492, %v674
        %686 = vst.msk [vmem:[%s682 + $0x32] sm:$0xff] %vm492, %v679
        %v687 = vld [vmem:[#allocation2] sm:$0xff]
        %v688 = vld [vmem:[#allocation2 + $0x10] sm:$0xff]
        %v689 = vld [vmem:[#allocation2 + $0x20] sm:$0xff]
        %v690 = vld [vmem:[#allocation2 + $0x30] sm:$0xff]
        %v691 = vld [vmem:[%s2] sm:$0x1]
        %v692 = vld [vmem:[%s2 + $0x1] sm:$0x1]
        %v693 = vld [vmem:[%s2 + $0x2] sm:$0x1]
        %v694 = vld [vmem:[%s2 + $0x3] sm:$0x1]
        %v699 = vlaneseq
        %v700 = vshrl.u32 %v699, 7
        %v701 = vsub.s32 0, %v700
        %v702 = vrot.slane %v691, %v701
        %v703 = vlaneseq
        %v704 = vshrl.u32 %v703, 7
        %v705 = vsub.s32 0, %v704
        %v706 = vrot.slane %v692, %v705
        %v707 = vlaneseq
        %v708 = vshrl.u32 %v707, 7
        %v709 = vsub.s32 0, %v708
        %v710 = vrot.slane %v693, %v709
        %v711 = vlaneseq
        %v712 = vshrl.u32 %v711, 7
        %v713 = vsub.s32 0, %v712
        %v714 = vrot.slane %v694, %v713
        %v719 = vmul.f32 %v687, %v702
        %v720 = vmul.f32 %v688, %v706
        %v721 = vmul.f32 %v689, %v710
        %v722 = vmul.f32 %v690, %v714
        %v723 = vadd.f32 %v719, 0.0
        %v724 = vadd.f32 %v720, 0.0
        %v725 = vadd.f32 %v721, 0.0
        %v726 = vadd.f32 %v722, 0.0
        %v727 = vld [vmem:[%s587] sm:$0xff]
        %v728 = vld [vmem:[%s587 + $0x10] sm:$0xff]
        %v729 = vld [vmem:[%s587 + $0x20] sm:$0xff]
        %v730 = vld [vmem:[%s587 + $0x30] sm:$0xff]
        %s731 = scalar_lea.vmem %s2, 4
        %v732 = vld [vmem:[%s731] sm:$0x1]
        %v733 = vld [vmem:[%s731 + $0x1] sm:$0x1]
        %v734 = vld [vmem:[%s731 + $0x2] sm:$0x1]
        %v735 = vld [vmem:[%s731 + $0x3] sm:$0x1]
        %v740 = vlaneseq
        %v741 = vshrl.u32 %v740, 7
        %v742 = vsub.s32 0, %v741
        %v743 = vrot.slane %v732, %v742
        %v744 = vlaneseq
        %v745 = vshrl.u32 %v744, 7
        %v746 = vsub.s32 0, %v745
        %v747 = vrot.slane %v733, %v746
        %v748 = vlaneseq
        %v749 = vshrl.u32 %v748, 7
        %v750 = vsub.s32 0, %v749
        %v751 = vrot.slane %v734, %v750
        %v752 = vlaneseq
        %v753 = vshrl.u32 %v752, 7
        %v754 = vsub.s32 0, %v753
        %v755 = vrot.slane %v735, %v754
        %v760 = vmul.f32 %v727, %v743
        %v761 = vmul.f32 %v728, %v747
        %v762 = vmul.f32 %v729, %v751
        %v763 = vmul.f32 %v730, %v755
        %v764 = vadd.f32 %v723, %v760
        %v765 = vadd.f32 %v724, %v761
        %v766 = vadd.f32 %v725, %v762
        %v767 = vadd.f32 %v726, %v763
        %v768 = vld [vmem:[%s682] sm:$0xff]
        %v769 = vld [vmem:[%s682 + $0x10] sm:$0xff]
        %v770 = vld [vmem:[%s682 + $0x20] sm:$0xff]
        %v771 = vld [vmem:[%s682 + $0x30] sm:$0xff]
        %s772 = scalar_lea.vmem %s2, 8
        %v773 = vld [vmem:[%s772] sm:$0x1]
        %v774 = vld [vmem:[%s772 + $0x1] sm:$0x1]
        %v775 = vld [vmem:[%s772 + $0x2] sm:$0x1]
        %v776 = vld [vmem:[%s772 + $0x3] sm:$0x1]
        %v781 = vlaneseq
        %v782 = vshrl.u32 %v781, 7
        %v783 = vsub.s32 0, %v782
        %v784 = vrot.slane %v773, %v783
        %v785 = vlaneseq
        %v786 = vshrl.u32 %v785, 7
        %v787 = vsub.s32 0, %v786
        %v788 = vrot.slane %v774, %v787
        %v789 = vlaneseq
        %v790 = vshrl.u32 %v789, 7
        %v791 = vsub.s32 0, %v790
        %v792 = vrot.slane %v775, %v791
        %v793 = vlaneseq
        %v794 = vshrl.u32 %v793, 7
        %v795 = vsub.s32 0, %v794
        %v796 = vrot.slane %v776, %v795
        %v801 = vmul.f32 %v768, %v784
        %v802 = vmul.f32 %v769, %v788
        %v803 = vmul.f32 %v770, %v792
        %v804 = vmul.f32 %v771, %v796
        %v805 = vadd.f32 %v764, %v801
        %v806 = vadd.f32 %v765, %v802
        %v807 = vadd.f32 %v766, %v803
        %v808 = vadd.f32 %v767, %v804
        %v809 = vld [vmem:[#allocation2 + $0x2] sm:$0xff]
        %v810 = vld [vmem:[#allocation2 + $0x12] sm:$0xff]
        %v811 = vld [vmem:[#allocation2 + $0x22] sm:$0xff]
        %v812 = vld [vmem:[#allocation2 + $0x32] sm:$0xff]
        %s813 = scalar_lea.vmem %s2, 12
        %v814 = vld [vmem:[%s813] sm:$0x1]
        %v815 = vld [vmem:[%s813 + $0x1] sm:$0x1]
        %v816 = vld [vmem:[%s813 + $0x2] sm:$0x1]
        %v817 = vld [vmem:[%s813 + $0x3] sm:$0x1]
        %v822 = vlaneseq
        %v823 = vshrl.u32 %v822, 7
        %v824 = vsub.s32 0, %v823
        %v825 = vrot.slane %v814, %v824
        %v826 = vlaneseq
        %v827 = vshrl.u32 %v826, 7
        %v828 = vsub.s32 0, %v827
        %v829 = vrot.slane %v815, %v828
        %v830 = vlaneseq
        %v831 = vshrl.u32 %v830, 7
        %v832 = vsub.s32 0, %v831
        %v833 = vrot.slane %v816, %v832
        %v834 = vlaneseq
        %v835 = vshrl.u32 %v834, 7
        %v836 = vsub.s32 0, %v835
        %v837 = vrot.slane %v817, %v836
        %v842 = vmul.f32 %v809, %v825
        %v843 = vmul.f32 %v810, %v829
        %v844 = vmul.f32 %v811, %v833
        %v845 = vmul.f32 %v812, %v837
        %v846 = vadd.f32 %v805, %v842
        %v847 = vadd.f32 %v806, %v843
        %v848 = vadd.f32 %v807, %v844
        %v849 = vadd.f32 %v808, %v845
        %v850 = vld [vmem:[%s587 + $0x2] sm:$0xff]
        %v851 = vld [vmem:[%s587 + $0x12] sm:$0xff]
        %v852 = vld [vmem:[%s587 + $0x22] sm:$0xff]
        %v853 = vld [vmem:[%s587 + $0x32] sm:$0xff]
        %s854 = scalar_lea.vmem %s2, 16
        %v855 = vld [vmem:[%s854] sm:$0x1]
        %v856 = vld [vmem:[%s854 + $0x1] sm:$0x1]
        %v857 = vld [vmem:[%s854 + $0x2] sm:$0x1]
        %v858 = vld [vmem:[%s854 + $0x3] sm:$0x1]
        %v863 = vlaneseq
        %v864 = vshrl.u32 %v863, 7
        %v865 = vsub.s32 0, %v864
        %v866 = vrot.slane %v855, %v865
        %v867 = vlaneseq
        %v868 = vshrl.u32 %v867, 7
        %v869 = vsub.s32 0, %v868
        %v870 = vrot.slane %v856, %v869
        %v871 = vlaneseq
        %v872 = vshrl.u32 %v871, 7
        %v873 = vsub.s32 0, %v872
        %v874 = vrot.slane %v857, %v873
        %v875 = vlaneseq
        %v876 = vshrl.u32 %v875, 7
        %v877 = vsub.s32 0, %v876
        %v878 = vrot.slane %v858, %v877
        %v883 = vmul.f32 %v850, %v866
        %v884 = vmul.f32 %v851, %v870
        %v885 = vmul.f32 %v852, %v874
        %v886 = vmul.f32 %v853, %v878
        %v887 = vadd.f32 %v846, %v883
        %v888 = vadd.f32 %v847, %v884
        %v889 = vadd.f32 %v848, %v885
        %v890 = vadd.f32 %v849, %v886
        %v891 = vld [vmem:[%s682 + $0x2] sm:$0xff]
        %v892 = vld [vmem:[%s682 + $0x12] sm:$0xff]
        %v893 = vld [vmem:[%s682 + $0x22] sm:$0xff]
        %v894 = vld [vmem:[%s682 + $0x32] sm:$0xff]
        %s895 = scalar_lea.vmem %s2, 20
        %v896 = vld [vmem:[%s895] sm:$0x1]
        %v897 = vld [vmem:[%s895 + $0x1] sm:$0x1]
        %v898 = vld [vmem:[%s895 + $0x2] sm:$0x1]
        %v899 = vld [vmem:[%s895 + $0x3] sm:$0x1]
        %v904 = vlaneseq
        %v905 = vshrl.u32 %v904, 7
        %v906 = vsub.s32 0, %v905
        %v907 = vrot.slane %v896, %v906
        %v908 = vlaneseq
        %v909 = vshrl.u32 %v908, 7
        %v910 = vsub.s32 0, %v909
        %v911 = vrot.slane %v897, %v910
        %v912 = vlaneseq
        %v913 = vshrl.u32 %v912, 7
        %v914 = vsub.s32 0, %v913
        %v915 = vrot.slane %v898, %v914
        %v916 = vlaneseq
        %v917 = vshrl.u32 %v916, 7
        %v918 = vsub.s32 0, %v917
        %v919 = vrot.slane %v899, %v918
        %v924 = vmul.f32 %v891, %v907
        %v925 = vmul.f32 %v892, %v911
        %v926 = vmul.f32 %v893, %v915
        %v927 = vmul.f32 %v894, %v919
        %v928 = vadd.f32 %v887, %v924
        %v929 = vadd.f32 %v888, %v925
        %v930 = vadd.f32 %v889, %v926
        %v931 = vadd.f32 %v890, %v927
        %v932 = vld [vmem:[#allocation2 + $0x4] sm:$0xff]
        %v933 = vld [vmem:[#allocation2 + $0x14] sm:$0xff]
        %v934 = vld [vmem:[#allocation2 + $0x24] sm:$0xff]
        %v935 = vld [vmem:[#allocation2 + $0x34] sm:$0xff]
        %s936 = scalar_lea.vmem %s2, 24
        %v937 = vld [vmem:[%s936] sm:$0x1]
        %v938 = vld [vmem:[%s936 + $0x1] sm:$0x1]
        %v939 = vld [vmem:[%s936 + $0x2] sm:$0x1]
        %v940 = vld [vmem:[%s936 + $0x3] sm:$0x1]
        %v945 = vlaneseq
        %v946 = vshrl.u32 %v945, 7
        %v947 = vsub.s32 0, %v946
        %v948 = vrot.slane %v937, %v947
        %v949 = vlaneseq
        %v950 = vshrl.u32 %v949, 7
        %v951 = vsub.s32 0, %v950
        %v952 = vrot.slane %v938, %v951
        %v953 = vlaneseq
        %v954 = vshrl.u32 %v953, 7
        %v955 = vsub.s32 0, %v954
        %v956 = vrot.slane %v939, %v955
        %v957 = vlaneseq
        %v958 = vshrl.u32 %v957, 7
        %v959 = vsub.s32 0, %v958
        %v960 = vrot.slane %v940, %v959
        %v965 = vmul.f32 %v932, %v948
        %v966 = vmul.f32 %v933, %v952
        %v967 = vmul.f32 %v934, %v956
        %v968 = vmul.f32 %v935, %v960
        %v969 = vadd.f32 %v928, %v965
        %v970 = vadd.f32 %v929, %v966
        %v971 = vadd.f32 %v930, %v967
        %v972 = vadd.f32 %v931, %v968
        %v973 = vld [vmem:[%s587 + $0x4] sm:$0xff]
        %v974 = vld [vmem:[%s587 + $0x14] sm:$0xff]
        %v975 = vld [vmem:[%s587 + $0x24] sm:$0xff]
        %v976 = vld [vmem:[%s587 + $0x34] sm:$0xff]
        %s977 = scalar_lea.vmem %s2, 28
        %v978 = vld [vmem:[%s977] sm:$0x1]
        %v979 = vld [vmem:[%s977 + $0x1] sm:$0x1]
        %v980 = vld [vmem:[%s977 + $0x2] sm:$0x1]
        %v981 = vld [vmem:[%s977 + $0x3] sm:$0x1]
        %v986 = vlaneseq
        %v987 = vshrl.u32 %v986, 7
        %v988 = vsub.s32 0, %v987
        %v989 = vrot.slane %v978, %v988
        %v990 = vlaneseq
        %v991 = vshrl.u32 %v990, 7
        %v992 = vsub.s32 0, %v991
        %v993 = vrot.slane %v979, %v992
        %v994 = vlaneseq
        %v995 = vshrl.u32 %v994, 7
        %v996 = vsub.s32 0, %v995
        %v997 = vrot.slane %v980, %v996
        %v998 = vlaneseq
        %v999 = vshrl.u32 %v998, 7
        %v1000 = vsub.s32 0, %v999
        %v1001 = vrot.slane %v981, %v1000
        %v1006 = vmul.f32 %v973, %v989
        %v1007 = vmul.f32 %v974, %v993
        %v1008 = vmul.f32 %v975, %v997
        %v1009 = vmul.f32 %v976, %v1001
        %v1010 = vadd.f32 %v969, %v1006
        %v1011 = vadd.f32 %v970, %v1007
        %v1012 = vadd.f32 %v971, %v1008
        %v1013 = vadd.f32 %v972, %v1009
        %v1014 = vld [vmem:[%s682 + $0x4] sm:$0xff]
        %v1015 = vld [vmem:[%s682 + $0x14] sm:$0xff]
        %v1016 = vld [vmem:[%s682 + $0x24] sm:$0xff]
        %v1017 = vld [vmem:[%s682 + $0x34] sm:$0xff]
        %s1018 = scalar_lea.vmem %s2, 32
        %v1019 = vld [vmem:[%s1018] sm:$0x1]
        %v1020 = vld [vmem:[%s1018 + $0x1] sm:$0x1]
        %v1021 = vld [vmem:[%s1018 + $0x2] sm:$0x1]
        %v1022 = vld [vmem:[%s1018 + $0x3] sm:$0x1]
        %v1027 = vlaneseq
        %v1028 = vshrl.u32 %v1027, 7
        %v1029 = vsub.s32 0, %v1028
        %v1030 = vrot.slane %v1019, %v1029
        %v1031 = vlaneseq
        %v1032 = vshrl.u32 %v1031, 7
        %v1033 = vsub.s32 0, %v1032
        %v1034 = vrot.slane %v1020, %v1033
        %v1035 = vlaneseq
        %v1036 = vshrl.u32 %v1035, 7
        %v1037 = vsub.s32 0, %v1036
        %v1038 = vrot.slane %v1021, %v1037
        %v1039 = vlaneseq
        %v1040 = vshrl.u32 %v1039, 7
        %v1041 = vsub.s32 0, %v1040
        %v1042 = vrot.slane %v1022, %v1041
        %v1047 = vmul.f32 %v1014, %v1030
        %v1048 = vmul.f32 %v1015, %v1034
        %v1049 = vmul.f32 %v1016, %v1038
        %v1050 = vmul.f32 %v1017, %v1042
        %v1051 = vadd.f32 %v1010, %v1047
        %v1052 = vadd.f32 %v1011, %v1048
        %v1053 = vadd.f32 %v1012, %v1049
        %v1054 = vadd.f32 %v1013, %v1050
        %s1055 = smul.u32 %s23, 32
        %s1056 = scalar_lea.vmem [#allocation3], %s1055
        %1057 = vst.msk [vmem:[%s1056] sm:$0xff] %vm492, %v1051
        %1058 = vst.msk [vmem:[%s1056 + $0x8] sm:$0xff] %vm492, %v1052
        %1059 = vst.msk [vmem:[%s1056 + $0x10] sm:$0xff] %vm492, %v1053
        %1060 = vst.msk [vmem:[%s1056 + $0x18] sm:$0xff] %vm492, %v1054
        %p1061 = scmp.eq.s32.totalorder %s23, 1
        // Predicated region
        $region77: #{cdblock3_pallas.1} parent=51 // pred_check
          %p1062 = pneg %p1061
        $region78: #{cdblock3_pallas.1} parent=51 // pred_check_branch
          %1064 = sbr.rel (%p1062) target = $region80
        $region79: #{cdblock3_pallas.1} parent=51 // pred_region
          %v1065 = vld [vmem:[#allocation3] sm:$0xff]
          %v1066 = vld [vmem:[#allocation3 + $0x20] sm:$0xff]
          %v1067 = vsel %vm492, %v1065, 0.0
          %v1068 = vsel %vm492, %v1066, 0.0
          %v1069 = vadd.f32 %v1067, %v1068
          %1070 = vadd.xlane.f32.xlu0 %v1069
          %v1071 = vpop.xlane.xlu0 %1070
          %v1072 = vrot.slane %v1071, 4
          %v1073 = vadd.f32 %v1071, %v1072
          %v1074 = vrot.slane %v1073, 2
          %v1075 = vadd.f32 %v1073, %v1074
          %v1076 = vrot.slane %v1075, 1
          %v1077 = vadd.f32 %v1075, %v1076
          %s1078 = vtos %v1077
          %s1079 = smul.f32 %s1078, 0.0078125
          %v1080 = vstv %s1079
          %v1081 = vsub.f32 %v1065, %v1080
          %v1082 = vsub.f32 %v1066, %v1080
          %v1083 = vmul.f32 %v1081, %v1081
          %v1084 = vmul.f32 %v1082, %v1082
          %v1085 = vsel %vm492, %v1083, 0.0
          %v1086 = vsel %vm492, %v1084, 0.0
          %v1087 = vadd.f32 %v1085, %v1086
          %1088 = vadd.xlane.f32.xlu0 %v1087
          %v1089 = vpop.xlane.xlu0 %1088
          %v1090 = vrot.slane %v1089, 4
          %v1091 = vadd.f32 %v1089, %v1090
          %v1092 = vrot.slane %v1091, 2
          %v1093 = vadd.f32 %v1091, %v1092
          %v1094 = vrot.slane %v1093, 1
          %v1095 = vadd.f32 %v1093, %v1094
          %s1096 = vtos %v1095
          %s1097 = smul.f32 %s1096, 0.0078125
          %s1098 = sadd.f32 %s1097, 1e-05
          %v1099 = vstv %s1098
          %v1100 = vrsqrt.pop %v1099
          %s1101 = vtos %v1100
          %v1102 = vstv %s1101
          %v1103 = vmul.f32 %v1081, %v1102
          %v1104 = vmul.f32 %v1082, %v1102
          %s1105 = sld [smem:[#allocation7]]
          %v1106 = vstv %s1105
          %v1107 = vmul.f32 %v1103, %v1106
          %v1108 = vmul.f32 %v1104, %v1106
          %s1109 = sld [smem:[#allocation9]]
          %v1110 = vstv %s1109
          %v1111 = vadd.f32 %v1107, %v1110
          %v1112 = vadd.f32 %v1108, %v1110
          %v1113 = vmax.f32 %v1111, 0.0
          %v1114 = vmax.f32 %v1112, 0.0
          %s1115 = scalar_lea.vmem [#allocation3], 8
          %v1116 = vld [vmem:[%s1115] sm:$0xff]
          %v1117 = vld [vmem:[%s1115 + $0x20] sm:$0xff]
          %v1118 = vsel %vm492, %v1116, 0.0
          %v1119 = vsel %vm492, %v1117, 0.0
          %v1120 = vadd.f32 %v1118, %v1119
          %1121 = vadd.xlane.f32.xlu0 %v1120
          %v1122 = vpop.xlane.xlu0 %1121
          %v1123 = vrot.slane %v1122, 4
          %v1124 = vadd.f32 %v1122, %v1123
          %v1125 = vrot.slane %v1124, 2
          %v1126 = vadd.f32 %v1124, %v1125
          %v1127 = vrot.slane %v1126, 1
          %v1128 = vadd.f32 %v1126, %v1127
          %s1129 = vtos %v1128
          %s1130 = smul.f32 %s1129, 0.0078125
          %v1131 = vstv %s1130
          %v1132 = vsub.f32 %v1116, %v1131
          %v1133 = vsub.f32 %v1117, %v1131
          %v1134 = vmul.f32 %v1132, %v1132
          %v1135 = vmul.f32 %v1133, %v1133
          %v1136 = vsel %vm492, %v1134, 0.0
          %v1137 = vsel %vm492, %v1135, 0.0
          %v1138 = vadd.f32 %v1136, %v1137
          %1139 = vadd.xlane.f32.xlu0 %v1138
          %v1140 = vpop.xlane.xlu0 %1139
          %v1141 = vrot.slane %v1140, 4
          %v1142 = vadd.f32 %v1140, %v1141
          %v1143 = vrot.slane %v1142, 2
          %v1144 = vadd.f32 %v1142, %v1143
          %v1145 = vrot.slane %v1144, 1
          %v1146 = vadd.f32 %v1144, %v1145
          %s1147 = vtos %v1146
          %s1148 = smul.f32 %s1147, 0.0078125
          %s1149 = sadd.f32 %s1148, 1e-05
          %v1150 = vstv %s1149
          %v1151 = vrsqrt.pop %v1150
          %s1152 = vtos %v1151
          %v1153 = vstv %s1152
          %v1154 = vmul.f32 %v1132, %v1153
          %v1155 = vmul.f32 %v1133, %v1153
          %s1156 = sld [smem:[#allocation7 + $0x1]]
          %v1157 = vstv %s1156
          %v1158 = vmul.f32 %v1154, %v1157
          %v1159 = vmul.f32 %v1155, %v1157
          %s1160 = sld [smem:[#allocation9 + $0x1]]
          %v1161 = vstv %s1160
          %v1162 = vadd.f32 %v1158, %v1161
          %v1163 = vadd.f32 %v1159, %v1161
          %v1164 = vmax.f32 %v1162, 0.0
          %v1165 = vmax.f32 %v1163, 0.0
          %s1166 = scalar_lea.vmem [#allocation3], 16
          %v1167 = vld [vmem:[%s1166] sm:$0xff]
          %v1168 = vld [vmem:[%s1166 + $0x20] sm:$0xff]
          %v1169 = vsel %vm492, %v1167, 0.0
          %v1170 = vsel %vm492, %v1168, 0.0
          %v1171 = vadd.f32 %v1169, %v1170
          %1172 = vadd.xlane.f32.xlu0 %v1171
          %v1173 = vpop.xlane.xlu0 %1172
          %v1174 = vrot.slane %v1173, 4
          %v1175 = vadd.f32 %v1173, %v1174
          %v1176 = vrot.slane %v1175, 2
          %v1177 = vadd.f32 %v1175, %v1176
          %v1178 = vrot.slane %v1177, 1
          %v1179 = vadd.f32 %v1177, %v1178
          %s1180 = vtos %v1179
          %s1181 = smul.f32 %s1180, 0.0078125
          %v1182 = vstv %s1181
          %v1183 = vsub.f32 %v1167, %v1182
          %v1184 = vsub.f32 %v1168, %v1182
          %v1185 = vmul.f32 %v1183, %v1183
          %v1186 = vmul.f32 %v1184, %v1184
          %v1187 = vsel %vm492, %v1185, 0.0
          %v1188 = vsel %vm492, %v1186, 0.0
          %v1189 = vadd.f32 %v1187, %v1188
          %1190 = vadd.xlane.f32.xlu0 %v1189
          %v1191 = vpop.xlane.xlu0 %1190
          %v1192 = vrot.slane %v1191, 4
          %v1193 = vadd.f32 %v1191, %v1192
          %v1194 = vrot.slane %v1193, 2
          %v1195 = vadd.f32 %v1193, %v1194
          %v1196 = vrot.slane %v1195, 1
          %v1197 = vadd.f32 %v1195, %v1196
          %s1198 = vtos %v1197
          %s1199 = smul.f32 %s1198, 0.0078125
          %s1200 = sadd.f32 %s1199, 1e-05
          %v1201 = vstv %s1200
          %v1202 = vrsqrt.pop %v1201
          %s1203 = vtos %v1202
          %v1204 = vstv %s1203
          %v1205 = vmul.f32 %v1183, %v1204
          %v1206 = vmul.f32 %v1184, %v1204
          %s1207 = sld [smem:[#allocation7 + $0x2]]
          %v1208 = vstv %s1207
          %v1209 = vmul.f32 %v1205, %v1208
          %v1210 = vmul.f32 %v1206, %v1208
          %s1211 = sld [smem:[#allocation9 + $0x2]]
          %v1212 = vstv %s1211
          %v1213 = vadd.f32 %v1209, %v1212
          %v1214 = vadd.f32 %v1210, %v1212
          %v1215 = vmax.f32 %v1213, 0.0
          %v1216 = vmax.f32 %v1214, 0.0
          %s1217 = scalar_lea.vmem [#allocation3], 24
          %v1218 = vld [vmem:[%s1217] sm:$0xff]
          %v1219 = vld [vmem:[%s1217 + $0x20] sm:$0xff]
          %v1220 = vsel %vm492, %v1218, 0.0
          %v1221 = vsel %vm492, %v1219, 0.0
          %v1222 = vadd.f32 %v1220, %v1221
          %1223 = vadd.xlane.f32.xlu0 %v1222
          %v1224 = vpop.xlane.xlu0 %1223
          %v1225 = vrot.slane %v1224, 4
          %v1226 = vadd.f32 %v1224, %v1225
          %v1227 = vrot.slane %v1226, 2
          %v1228 = vadd.f32 %v1226, %v1227
          %v1229 = vrot.slane %v1228, 1
          %v1230 = vadd.f32 %v1228, %v1229
          %s1231 = vtos %v1230
          %s1232 = smul.f32 %s1231, 0.0078125
          %v1233 = vstv %s1232
          %v1234 = vsub.f32 %v1218, %v1233
          %v1235 = vsub.f32 %v1219, %v1233
          %v1236 = vmul.f32 %v1234, %v1234
          %v1237 = vmul.f32 %v1235, %v1235
          %v1238 = vsel %vm492, %v1236, 0.0
          %v1239 = vsel %vm492, %v1237, 0.0
          %v1240 = vadd.f32 %v1238, %v1239
          %1241 = vadd.xlane.f32.xlu0 %v1240
          %v1242 = vpop.xlane.xlu0 %1241
          %v1243 = vrot.slane %v1242, 4
          %v1244 = vadd.f32 %v1242, %v1243
          %v1245 = vrot.slane %v1244, 2
          %v1246 = vadd.f32 %v1244, %v1245
          %v1247 = vrot.slane %v1246, 1
          %v1248 = vadd.f32 %v1246, %v1247
          %s1249 = vtos %v1248
          %s1250 = smul.f32 %s1249, 0.0078125
          %s1251 = sadd.f32 %s1250, 1e-05
          %v1252 = vstv %s1251
          %v1253 = vrsqrt.pop %v1252
          %s1254 = vtos %v1253
          %v1255 = vstv %s1254
          %v1256 = vmul.f32 %v1234, %v1255
          %v1257 = vmul.f32 %v1235, %v1255
          %s1258 = sld [smem:[#allocation7 + $0x3]]
          %v1259 = vstv %s1258
          %v1260 = vmul.f32 %v1256, %v1259
          %v1261 = vmul.f32 %v1257, %v1259
          %s1262 = sld [smem:[#allocation9 + $0x3]]
          %v1263 = vstv %s1262
          %v1264 = vadd.f32 %v1260, %v1263
          %v1265 = vadd.f32 %v1261, %v1263
          %v1266 = vmax.f32 %v1264, 0.0
          %v1267 = vmax.f32 %v1265, 0.0
          %s1268 = sld [smem:[#allocation4]]
          %v1269 = vstv %s1268
          %v1270 = vmul.f32 %v1113, %v1269
          %v1271 = vmul.f32 %v1114, %v1269
          %s1272 = sld [smem:[#allocation4 + $0x1]]
          %v1273 = vstv %s1272
          %v1274 = vmul.f32 %v1164, %v1273
          %v1275 = vmul.f32 %v1165, %v1273
          %v1276 = vadd.f32 %v1270, %v1274
          %v1277 = vadd.f32 %v1271, %v1275
          %s1278 = sld [smem:[#allocation4 + $0x2]]
          %v1279 = vstv %s1278
          %v1280 = vmul.f32 %v1215, %v1279
          %v1281 = vmul.f32 %v1216, %v1279
          %v1282 = vadd.f32 %v1276, %v1280
          %v1283 = vadd.f32 %v1277, %v1281
          %s1284 = sld [smem:[#allocation4 + $0x3]]
          %v1285 = vstv %s1284
          %v1286 = vmul.f32 %v1266, %v1285
          %v1287 = vmul.f32 %v1267, %v1285
          %v1288 = vadd.f32 %v1282, %v1286
          %v1289 = vadd.f32 %v1283, %v1287
          %v1290 = vsel %vm492, %v1288, 0.0
          %v1291 = vsel %vm492, %v1289, 0.0
          %v1292 = vadd.f32 %v1290, %v1291
          %1293 = vadd.xlane.f32.xlu0 %v1292
          %v1294 = vpop.xlane.xlu0 %1293
          %v1295 = vrot.slane %v1294, 4
          %v1296 = vadd.f32 %v1294, %v1295
          %v1297 = vrot.slane %v1296, 2
          %v1298 = vadd.f32 %v1296, %v1297
          %v1299 = vrot.slane %v1298, 1
          %v1300 = vadd.f32 %v1298, %v1299
          %s1301 = vtos %v1300
          %s1302 = smul.f32 %s1301, 0.0078125
          %v1303 = vstv %s1302
          %v1304 = vsub.f32 %v1288, %v1303
          %v1305 = vsub.f32 %v1289, %v1303
          %v1306 = vmul.f32 %v1304, %v1304
          %v1307 = vmul.f32 %v1305, %v1305
          %v1308 = vsel %vm492, %v1306, 0.0
          %v1309 = vsel %vm492, %v1307, 0.0
          %v1310 = vadd.f32 %v1308, %v1309
          %1311 = vadd.xlane.f32.xlu0 %v1310
          %v1312 = vpop.xlane.xlu0 %1311
          %v1313 = vrot.slane %v1312, 4
          %v1314 = vadd.f32 %v1312, %v1313
          %v1315 = vrot.slane %v1314, 2
          %v1316 = vadd.f32 %v1314, %v1315
          %v1317 = vrot.slane %v1316, 1
          %v1318 = vadd.f32 %v1316, %v1317
          %s1319 = vtos %v1318
          %s1320 = smul.f32 %s1319, 0.0078125
          %s1321 = sadd.f32 %s1320, 1e-05
          %v1322 = vstv %s1321
          %v1323 = vrsqrt.pop %v1322
          %s1324 = vtos %v1323
          %v1325 = vstv %s1324
          %v1326 = vmul.f32 %v1304, %v1325
          %v1327 = vmul.f32 %v1305, %v1325
          %s1328 = sld [smem:[#allocation10]]
          %v1329 = vstv %s1328
          %v1330 = vmul.f32 %v1326, %v1329
          %v1331 = vmul.f32 %v1327, %v1329
          %s1332 = sld [smem:[#allocation12]]
          %v1333 = vstv %s1332
          %v1334 = vadd.f32 %v1330, %v1333
          %v1335 = vadd.f32 %v1331, %v1333
          %v1336 = vmax.f32 %v1334, 0.0
          %v1337 = vmax.f32 %v1335, 0.0
          %1338 = vst.msk [vmem:[#allocation13] sm:$0xff] %vm492, %v1336
          %1339 = vst.msk [vmem:[#allocation13 + $0x40] sm:$0xff] %vm492, %v1337
          %s1340 = sld [smem:[#allocation4 + $0x80]]
          %v1341 = vstv %s1340
          %v1342 = vmul.f32 %v1113, %v1341
          %v1343 = vmul.f32 %v1114, %v1341
          %s1344 = sld [smem:[#allocation4 + $0x81]]
          %v1345 = vstv %s1344
          %v1346 = vmul.f32 %v1164, %v1345
          %v1347 = vmul.f32 %v1165, %v1345
          %v1348 = vadd.f32 %v1342, %v1346
          %v1349 = vadd.f32 %v1343, %v1347
          %s1350 = sld [smem:[#allocation4 + $0x82]]
          %v1351 = vstv %s1350
          %v1352 = vmul.f32 %v1215, %v1351
          %v1353 = vmul.f32 %v1216, %v1351
          %v1354 = vadd.f32 %v1348, %v1352
          %v1355 = vadd.f32 %v1349, %v1353
          %s1356 = sld [smem:[#allocation4 + $0x83]]
          %v1357 = vstv %s1356
          %v1358 = vmul.f32 %v1266, %v1357
          %v1359 = vmul.f32 %v1267, %v1357
          %v1360 = vadd.f32 %v1354, %v1358
          %v1361 = vadd.f32 %v1355, %v1359
          %v1362 = vsel %vm492, %v1360, 0.0
          %v1363 = vsel %vm492, %v1361, 0.0
          %v1364 = vadd.f32 %v1362, %v1363
          %1365 = vadd.xlane.f32.xlu0 %v1364
          %v1366 = vpop.xlane.xlu0 %1365
          %v1367 = vrot.slane %v1366, 4
          %v1368 = vadd.f32 %v1366, %v1367
          %v1369 = vrot.slane %v1368, 2
          %v1370 = vadd.f32 %v1368, %v1369
          %v1371 = vrot.slane %v1370, 1
          %v1372 = vadd.f32 %v1370, %v1371
          %s1373 = vtos %v1372
          %s1374 = smul.f32 %s1373, 0.0078125
          %v1375 = vstv %s1374
          %v1376 = vsub.f32 %v1360, %v1375
          %v1377 = vsub.f32 %v1361, %v1375
          %v1378 = vmul.f32 %v1376, %v1376
          %v1379 = vmul.f32 %v1377, %v1377
          %v1380 = vsel %vm492, %v1378, 0.0
          %v1381 = vsel %vm492, %v1379, 0.0
          %v1382 = vadd.f32 %v1380, %v1381
          %1383 = vadd.xlane.f32.xlu0 %v1382
          %v1384 = vpop.xlane.xlu0 %1383
          %v1385 = vrot.slane %v1384, 4
          %v1386 = vadd.f32 %v1384, %v1385
          %v1387 = vrot.slane %v1386, 2
          %v1388 = vadd.f32 %v1386, %v1387
          %v1389 = vrot.slane %v1388, 1
          %v1390 = vadd.f32 %v1388, %v1389
          %s1391 = vtos %v1390
          %s1392 = smul.f32 %s1391, 0.0078125
          %s1393 = sadd.f32 %s1392, 1e-05
          %v1394 = vstv %s1393
          %v1395 = vrsqrt.pop %v1394
          %s1396 = vtos %v1395
          %v1397 = vstv %s1396
          %v1398 = vmul.f32 %v1376, %v1397
          %v1399 = vmul.f32 %v1377, %v1397
          %s1400 = sld [smem:[#allocation10 + $0x1]]
          %v1401 = vstv %s1400
          %v1402 = vmul.f32 %v1398, %v1401
          %v1403 = vmul.f32 %v1399, %v1401
          %s1404 = sld [smem:[#allocation12 + $0x1]]
          %v1405 = vstv %s1404
          %v1406 = vadd.f32 %v1402, %v1405
          %v1407 = vadd.f32 %v1403, %v1405
          %v1408 = vmax.f32 %v1406, 0.0
          %v1409 = vmax.f32 %v1407, 0.0
          %s1410 = scalar_lea.vmem [#allocation13], 8
          %1411 = vst.msk [vmem:[%s1410] sm:$0xff] %vm492, %v1408
          %1412 = vst.msk [vmem:[%s1410 + $0x40] sm:$0xff] %vm492, %v1409
          %s1413 = sld [smem:[#allocation4 + $0x100]]
          %v1414 = vstv %s1413
          %v1415 = vmul.f32 %v1113, %v1414
          %v1416 = vmul.f32 %v1114, %v1414
          %s1417 = sld [smem:[#allocation4 + $0x101]]
          %v1418 = vstv %s1417
          %v1419 = vmul.f32 %v1164, %v1418
          %v1420 = vmul.f32 %v1165, %v1418
          %v1421 = vadd.f32 %v1415, %v1419
          %v1422 = vadd.f32 %v1416, %v1420
          %s1423 = sld [smem:[#allocation4 + $0x102]]
          %v1424 = vstv %s1423
          %v1425 = vmul.f32 %v1215, %v1424
          %v1426 = vmul.f32 %v1216, %v1424
          %v1427 = vadd.f32 %v1421, %v1425
          %v1428 = vadd.f32 %v1422, %v1426
          %s1429 = sld [smem:[#allocation4 + $0x103]]
          %v1430 = vstv %s1429
          %v1431 = vmul.f32 %v1266, %v1430
          %v1432 = vmul.f32 %v1267, %v1430
          %v1433 = vadd.f32 %v1427, %v1431
          %v1434 = vadd.f32 %v1428, %v1432
          %v1435 = vsel %vm492, %v1433, 0.0
          %v1436 = vsel %vm492, %v1434, 0.0
          %v1437 = vadd.f32 %v1435, %v1436
          %1438 = vadd.xlane.f32.xlu0 %v1437
          %v1439 = vpop.xlane.xlu0 %1438
          %v1440 = vrot.slane %v1439, 4
          %v1441 = vadd.f32 %v1439, %v1440
          %v1442 = vrot.slane %v1441, 2
          %v1443 = vadd.f32 %v1441, %v1442
          %v1444 = vrot.slane %v1443, 1
          %v1445 = vadd.f32 %v1443, %v1444
          %s1446 = vtos %v1445
          %s1447 = smul.f32 %s1446, 0.0078125
          %v1448 = vstv %s1447
          %v1449 = vsub.f32 %v1433, %v1448
          %v1450 = vsub.f32 %v1434, %v1448
          %v1451 = vmul.f32 %v1449, %v1449
          %v1452 = vmul.f32 %v1450, %v1450
          %v1453 = vsel %vm492, %v1451, 0.0
          %v1454 = vsel %vm492, %v1452, 0.0
          %v1455 = vadd.f32 %v1453, %v1454
          %1456 = vadd.xlane.f32.xlu0 %v1455
          %v1457 = vpop.xlane.xlu0 %1456
          %v1458 = vrot.slane %v1457, 4
          %v1459 = vadd.f32 %v1457, %v1458
          %v1460 = vrot.slane %v1459, 2
          %v1461 = vadd.f32 %v1459, %v1460
          %v1462 = vrot.slane %v1461, 1
          %v1463 = vadd.f32 %v1461, %v1462
          %s1464 = vtos %v1463
          %s1465 = smul.f32 %s1464, 0.0078125
          %s1466 = sadd.f32 %s1465, 1e-05
          %v1467 = vstv %s1466
          %v1468 = vrsqrt.pop %v1467
          %s1469 = vtos %v1468
          %v1470 = vstv %s1469
          %v1471 = vmul.f32 %v1449, %v1470
          %v1472 = vmul.f32 %v1450, %v1470
          %s1473 = sld [smem:[#allocation10 + $0x2]]
          %v1474 = vstv %s1473
          %v1475 = vmul.f32 %v1471, %v1474
          %v1476 = vmul.f32 %v1472, %v1474
          %s1477 = sld [smem:[#allocation12 + $0x2]]
          %v1478 = vstv %s1477
          %v1479 = vadd.f32 %v1475, %v1478
          %v1480 = vadd.f32 %v1476, %v1478
          %v1481 = vmax.f32 %v1479, 0.0
          %v1482 = vmax.f32 %v1480, 0.0
          %s1483 = scalar_lea.vmem [#allocation13], 16
          %1484 = vst.msk [vmem:[%s1483] sm:$0xff] %vm492, %v1481
          %1485 = vst.msk [vmem:[%s1483 + $0x40] sm:$0xff] %vm492, %v1482
          %s1486 = sld [smem:[#allocation4 + $0x180]]
          %v1487 = vstv %s1486
          %v1488 = vmul.f32 %v1113, %v1487
          %v1489 = vmul.f32 %v1114, %v1487
          %s1490 = sld [smem:[#allocation4 + $0x181]]
          %v1491 = vstv %s1490
          %v1492 = vmul.f32 %v1164, %v1491
          %v1493 = vmul.f32 %v1165, %v1491
          %v1494 = vadd.f32 %v1488, %v1492
          %v1495 = vadd.f32 %v1489, %v1493
          %s1496 = sld [smem:[#allocation4 + $0x182]]
          %v1497 = vstv %s1496
          %v1498 = vmul.f32 %v1215, %v1497
          %v1499 = vmul.f32 %v1216, %v1497
          %v1500 = vadd.f32 %v1494, %v1498
          %v1501 = vadd.f32 %v1495, %v1499
          %s1502 = sld [smem:[#allocation4 + $0x183]]
          %v1503 = vstv %s1502
          %v1504 = vmul.f32 %v1266, %v1503
          %v1505 = vmul.f32 %v1267, %v1503
          %v1506 = vadd.f32 %v1500, %v1504
          %v1507 = vadd.f32 %v1501, %v1505
          %v1508 = vsel %vm492, %v1506, 0.0
          %v1509 = vsel %vm492, %v1507, 0.0
          %v1510 = vadd.f32 %v1508, %v1509
          %1511 = vadd.xlane.f32.xlu0 %v1510
          %v1512 = vpop.xlane.xlu0 %1511
          %v1513 = vrot.slane %v1512, 4
          %v1514 = vadd.f32 %v1512, %v1513
          %v1515 = vrot.slane %v1514, 2
          %v1516 = vadd.f32 %v1514, %v1515
          %v1517 = vrot.slane %v1516, 1
          %v1518 = vadd.f32 %v1516, %v1517
          %s1519 = vtos %v1518
          %s1520 = smul.f32 %s1519, 0.0078125
          %v1521 = vstv %s1520
          %v1522 = vsub.f32 %v1506, %v1521
          %v1523 = vsub.f32 %v1507, %v1521
          %v1524 = vmul.f32 %v1522, %v1522
          %v1525 = vmul.f32 %v1523, %v1523
          %v1526 = vsel %vm492, %v1524, 0.0
          %v1527 = vsel %vm492, %v1525, 0.0
          %v1528 = vadd.f32 %v1526, %v1527
          %1529 = vadd.xlane.f32.xlu0 %v1528
          %v1530 = vpop.xlane.xlu0 %1529
          %v1531 = vrot.slane %v1530, 4
          %v1532 = vadd.f32 %v1530, %v1531
          %v1533 = vrot.slane %v1532, 2
          %v1534 = vadd.f32 %v1532, %v1533
          %v1535 = vrot.slane %v1534, 1
          %v1536 = vadd.f32 %v1534, %v1535
          %s1537 = vtos %v1536
          %s1538 = smul.f32 %s1537, 0.0078125
          %s1539 = sadd.f32 %s1538, 1e-05
          %v1540 = vstv %s1539
          %v1541 = vrsqrt.pop %v1540
          %s1542 = vtos %v1541
          %v1543 = vstv %s1542
          %v1544 = vmul.f32 %v1522, %v1543
          %v1545 = vmul.f32 %v1523, %v1543
          %s1546 = sld [smem:[#allocation10 + $0x3]]
          %v1547 = vstv %s1546
          %v1548 = vmul.f32 %v1544, %v1547
          %v1549 = vmul.f32 %v1545, %v1547
          %s1550 = sld [smem:[#allocation12 + $0x3]]
          %v1551 = vstv %s1550
          %v1552 = vadd.f32 %v1548, %v1551
          %v1553 = vadd.f32 %v1549, %v1551
          %v1554 = vmax.f32 %v1552, 0.0
          %v1555 = vmax.f32 %v1553, 0.0
          %s1556 = scalar_lea.vmem [#allocation13], 24
          %1557 = vst.msk [vmem:[%s1556] sm:$0xff] %vm492, %v1554
          %1558 = vst.msk [vmem:[%s1556 + $0x40] sm:$0xff] %vm492, %v1555
          %s1559 = sld [smem:[#allocation4 + $0x200]]
          %v1560 = vstv %s1559
          %v1561 = vmul.f32 %v1113, %v1560
          %v1562 = vmul.f32 %v1114, %v1560
          %s1563 = sld [smem:[#allocation4 + $0x201]]
          %v1564 = vstv %s1563
          %v1565 = vmul.f32 %v1164, %v1564
          %v1566 = vmul.f32 %v1165, %v1564
          %v1567 = vadd.f32 %v1561, %v1565
          %v1568 = vadd.f32 %v1562, %v1566
          %s1569 = sld [smem:[#allocation4 + $0x202]]
          %v1570 = vstv %s1569
          %v1571 = vmul.f32 %v1215, %v1570
          %v1572 = vmul.f32 %v1216, %v1570
          %v1573 = vadd.f32 %v1567, %v1571
          %v1574 = vadd.f32 %v1568, %v1572
          %s1575 = sld [smem:[#allocation4 + $0x203]]
          %v1576 = vstv %s1575
          %v1577 = vmul.f32 %v1266, %v1576
          %v1578 = vmul.f32 %v1267, %v1576
          %v1579 = vadd.f32 %v1573, %v1577
          %v1580 = vadd.f32 %v1574, %v1578
          %v1581 = vsel %vm492, %v1579, 0.0
          %v1582 = vsel %vm492, %v1580, 0.0
          %v1583 = vadd.f32 %v1581, %v1582
          %1584 = vadd.xlane.f32.xlu0 %v1583
          %v1585 = vpop.xlane.xlu0 %1584
          %v1586 = vrot.slane %v1585, 4
          %v1587 = vadd.f32 %v1585, %v1586
          %v1588 = vrot.slane %v1587, 2
          %v1589 = vadd.f32 %v1587, %v1588
          %v1590 = vrot.slane %v1589, 1
          %v1591 = vadd.f32 %v1589, %v1590
          %s1592 = vtos %v1591
          %s1593 = smul.f32 %s1592, 0.0078125
          %v1594 = vstv %s1593
          %v1595 = vsub.f32 %v1579, %v1594
          %v1596 = vsub.f32 %v1580, %v1594
          %v1597 = vmul.f32 %v1595, %v1595
          %v1598 = vmul.f32 %v1596, %v1596
          %v1599 = vsel %vm492, %v1597, 0.0
          %v1600 = vsel %vm492, %v1598, 0.0
          %v1601 = vadd.f32 %v1599, %v1600
          %1602 = vadd.xlane.f32.xlu0 %v1601
          %v1603 = vpop.xlane.xlu0 %1602
          %v1604 = vrot.slane %v1603, 4
          %v1605 = vadd.f32 %v1603, %v1604
          %v1606 = vrot.slane %v1605, 2
          %v1607 = vadd.f32 %v1605, %v1606
          %v1608 = vrot.slane %v1607, 1
          %v1609 = vadd.f32 %v1607, %v1608
          %s1610 = vtos %v1609
          %s1611 = smul.f32 %s1610, 0.0078125
          %s1612 = sadd.f32 %s1611, 1e-05
          %v1613 = vstv %s1612
          %v1614 = vrsqrt.pop %v1613
          %s1615 = vtos %v1614
          %v1616 = vstv %s1615
          %v1617 = vmul.f32 %v1595, %v1616
          %v1618 = vmul.f32 %v1596, %v1616
          %s1619 = sld [smem:[#allocation10 + $0x4]]
          %v1620 = vstv %s1619
          %v1621 = vmul.f32 %v1617, %v1620
          %v1622 = vmul.f32 %v1618, %v1620
          %s1623 = sld [smem:[#allocation12 + $0x4]]
          %v1624 = vstv %s1623
          %v1625 = vadd.f32 %v1621, %v1624
          %v1626 = vadd.f32 %v1622, %v1624
          %v1627 = vmax.f32 %v1625, 0.0
          %v1628 = vmax.f32 %v1626, 0.0
          %s1629 = scalar_lea.vmem [#allocation13], 32
          %1630 = vst.msk [vmem:[%s1629] sm:$0xff] %vm492, %v1627
          %1631 = vst.msk [vmem:[%s1629 + $0x40] sm:$0xff] %vm492, %v1628
          %s1632 = sld [smem:[#allocation4 + $0x280]]
          %v1633 = vstv %s1632
          %v1634 = vmul.f32 %v1113, %v1633
          %v1635 = vmul.f32 %v1114, %v1633
          %s1636 = sld [smem:[#allocation4 + $0x281]]
          %v1637 = vstv %s1636
          %v1638 = vmul.f32 %v1164, %v1637
          %v1639 = vmul.f32 %v1165, %v1637
          %v1640 = vadd.f32 %v1634, %v1638
          %v1641 = vadd.f32 %v1635, %v1639
          %s1642 = sld [smem:[#allocation4 + $0x282]]
          %v1643 = vstv %s1642
          %v1644 = vmul.f32 %v1215, %v1643
          %v1645 = vmul.f32 %v1216, %v1643
          %v1646 = vadd.f32 %v1640, %v1644
          %v1647 = vadd.f32 %v1641, %v1645
          %s1648 = sld [smem:[#allocation4 + $0x283]]
          %v1649 = vstv %s1648
          %v1650 = vmul.f32 %v1266, %v1649
          %v1651 = vmul.f32 %v1267, %v1649
          %v1652 = vadd.f32 %v1646, %v1650
          %v1653 = vadd.f32 %v1647, %v1651
          %v1654 = vsel %vm492, %v1652, 0.0
          %v1655 = vsel %vm492, %v1653, 0.0
          %v1656 = vadd.f32 %v1654, %v1655
          %1657 = vadd.xlane.f32.xlu0 %v1656
          %v1658 = vpop.xlane.xlu0 %1657
          %v1659 = vrot.slane %v1658, 4
          %v1660 = vadd.f32 %v1658, %v1659
          %v1661 = vrot.slane %v1660, 2
          %v1662 = vadd.f32 %v1660, %v1661
          %v1663 = vrot.slane %v1662, 1
          %v1664 = vadd.f32 %v1662, %v1663
          %s1665 = vtos %v1664
          %s1666 = smul.f32 %s1665, 0.0078125
          %v1667 = vstv %s1666
          %v1668 = vsub.f32 %v1652, %v1667
          %v1669 = vsub.f32 %v1653, %v1667
          %v1670 = vmul.f32 %v1668, %v1668
          %v1671 = vmul.f32 %v1669, %v1669
          %v1672 = vsel %vm492, %v1670, 0.0
          %v1673 = vsel %vm492, %v1671, 0.0
          %v1674 = vadd.f32 %v1672, %v1673
          %1675 = vadd.xlane.f32.xlu0 %v1674
          %v1676 = vpop.xlane.xlu0 %1675
          %v1677 = vrot.slane %v1676, 4
          %v1678 = vadd.f32 %v1676, %v1677
          %v1679 = vrot.slane %v1678, 2
          %v1680 = vadd.f32 %v1678, %v1679
          %v1681 = vrot.slane %v1680, 1
          %v1682 = vadd.f32 %v1680, %v1681
          %s1683 = vtos %v1682
          %s1684 = smul.f32 %s1683, 0.0078125
          %s1685 = sadd.f32 %s1684, 1e-05
          %v1686 = vstv %s1685
          %v1687 = vrsqrt.pop %v1686
          %s1688 = vtos %v1687
          %v1689 = vstv %s1688
          %v1690 = vmul.f32 %v1668, %v1689
          %v1691 = vmul.f32 %v1669, %v1689
          %s1692 = sld [smem:[#allocation10 + $0x5]]
          %v1693 = vstv %s1692
          %v1694 = vmul.f32 %v1690, %v1693
          %v1695 = vmul.f32 %v1691, %v1693
          %s1696 = sld [smem:[#allocation12 + $0x5]]
          %v1697 = vstv %s1696
          %v1698 = vadd.f32 %v1694, %v1697
          %v1699 = vadd.f32 %v1695, %v1697
          %v1700 = vmax.f32 %v1698, 0.0
          %v1701 = vmax.f32 %v1699, 0.0
          %s1702 = scalar_lea.vmem [#allocation13], 40
          %1703 = vst.msk [vmem:[%s1702] sm:$0xff] %vm492, %v1700
          %1704 = vst.msk [vmem:[%s1702 + $0x40] sm:$0xff] %vm492, %v1701
          %s1705 = sld [smem:[#allocation4 + $0x300]]
          %v1706 = vstv %s1705
          %v1707 = vmul.f32 %v1113, %v1706
          %v1708 = vmul.f32 %v1114, %v1706
          %s1709 = sld [smem:[#allocation4 + $0x301]]
          %v1710 = vstv %s1709
          %v1711 = vmul.f32 %v1164, %v1710
          %v1712 = vmul.f32 %v1165, %v1710
          %v1713 = vadd.f32 %v1707, %v1711
          %v1714 = vadd.f32 %v1708, %v1712
          %s1715 = sld [smem:[#allocation4 + $0x302]]
          %v1716 = vstv %s1715
          %v1717 = vmul.f32 %v1215, %v1716
          %v1718 = vmul.f32 %v1216, %v1716
          %v1719 = vadd.f32 %v1713, %v1717
          %v1720 = vadd.f32 %v1714, %v1718
          %s1721 = sld [smem:[#allocation4 + $0x303]]
          %v1722 = vstv %s1721
          %v1723 = vmul.f32 %v1266, %v1722
          %v1724 = vmul.f32 %v1267, %v1722
          %v1725 = vadd.f32 %v1719, %v1723
          %v1726 = vadd.f32 %v1720, %v1724
          %v1727 = vsel %vm492, %v1725, 0.0
          %v1728 = vsel %vm492, %v1726, 0.0
          %v1729 = vadd.f32 %v1727, %v1728
          %1730 = vadd.xlane.f32.xlu0 %v1729
          %v1731 = vpop.xlane.xlu0 %1730
          %v1732 = vrot.slane %v1731, 4
          %v1733 = vadd.f32 %v1731, %v1732
          %v1734 = vrot.slane %v1733, 2
          %v1735 = vadd.f32 %v1733, %v1734
          %v1736 = vrot.slane %v1735, 1
          %v1737 = vadd.f32 %v1735, %v1736
          %s1738 = vtos %v1737
          %s1739 = smul.f32 %s1738, 0.0078125
          %v1740 = vstv %s1739
          %v1741 = vsub.f32 %v1725, %v1740
          %v1742 = vsub.f32 %v1726, %v1740
          %v1743 = vmul.f32 %v1741, %v1741
          %v1744 = vmul.f32 %v1742, %v1742
          %v1745 = vsel %vm492, %v1743, 0.0
          %v1746 = vsel %vm492, %v1744, 0.0
          %v1747 = vadd.f32 %v1745, %v1746
          %1748 = vadd.xlane.f32.xlu0 %v1747
          %v1749 = vpop.xlane.xlu0 %1748
          %v1750 = vrot.slane %v1749, 4
          %v1751 = vadd.f32 %v1749, %v1750
          %v1752 = vrot.slane %v1751, 2
          %v1753 = vadd.f32 %v1751, %v1752
          %v1754 = vrot.slane %v1753, 1
          %v1755 = vadd.f32 %v1753, %v1754
          %s1756 = vtos %v1755
          %s1757 = smul.f32 %s1756, 0.0078125
          %s1758 = sadd.f32 %s1757, 1e-05
          %v1759 = vstv %s1758
          %v1760 = vrsqrt.pop %v1759
          %s1761 = vtos %v1760
          %v1762 = vstv %s1761
          %v1763 = vmul.f32 %v1741, %v1762
          %v1764 = vmul.f32 %v1742, %v1762
          %s1765 = sld [smem:[#allocation10 + $0x6]]
          %v1766 = vstv %s1765
          %v1767 = vmul.f32 %v1763, %v1766
          %v1768 = vmul.f32 %v1764, %v1766
          %s1769 = sld [smem:[#allocation12 + $0x6]]
          %v1770 = vstv %s1769
          %v1771 = vadd.f32 %v1767, %v1770
          %v1772 = vadd.f32 %v1768, %v1770
          %v1773 = vmax.f32 %v1771, 0.0
          %v1774 = vmax.f32 %v1772, 0.0
          %s1775 = scalar_lea.vmem [#allocation13], 48
          %1776 = vst.msk [vmem:[%s1775] sm:$0xff] %vm492, %v1773
          %1777 = vst.msk [vmem:[%s1775 + $0x40] sm:$0xff] %vm492, %v1774
          %s1778 = sld [smem:[#allocation4 + $0x380]]
          %v1779 = vstv %s1778
          %v1780 = vmul.f32 %v1113, %v1779
          %v1781 = vmul.f32 %v1114, %v1779
          %s1782 = sld [smem:[#allocation4 + $0x381]]
          %v1783 = vstv %s1782
          %v1784 = vmul.f32 %v1164, %v1783
          %v1785 = vmul.f32 %v1165, %v1783
          %v1786 = vadd.f32 %v1780, %v1784
          %v1787 = vadd.f32 %v1781, %v1785
          %s1788 = sld [smem:[#allocation4 + $0x382]]
          %v1789 = vstv %s1788
          %v1790 = vmul.f32 %v1215, %v1789
          %v1791 = vmul.f32 %v1216, %v1789
          %v1792 = vadd.f32 %v1786, %v1790
          %v1793 = vadd.f32 %v1787, %v1791
          %s1794 = sld [smem:[#allocation4 + $0x383]]
          %v1795 = vstv %s1794
          %v1796 = vmul.f32 %v1266, %v1795
          %v1797 = vmul.f32 %v1267, %v1795
          %v1798 = vadd.f32 %v1792, %v1796
          %v1799 = vadd.f32 %v1793, %v1797
          %v1800 = vsel %vm492, %v1798, 0.0
          %v1801 = vsel %vm492, %v1799, 0.0
          %v1802 = vadd.f32 %v1800, %v1801
          %1803 = vadd.xlane.f32.xlu0 %v1802
          %v1804 = vpop.xlane.xlu0 %1803
          %v1805 = vrot.slane %v1804, 4
          %v1806 = vadd.f32 %v1804, %v1805
          %v1807 = vrot.slane %v1806, 2
          %v1808 = vadd.f32 %v1806, %v1807
          %v1809 = vrot.slane %v1808, 1
          %v1810 = vadd.f32 %v1808, %v1809
          %s1811 = vtos %v1810
          %s1812 = smul.f32 %s1811, 0.0078125
          %v1813 = vstv %s1812
          %v1814 = vsub.f32 %v1798, %v1813
          %v1815 = vsub.f32 %v1799, %v1813
          %v1816 = vmul.f32 %v1814, %v1814
          %v1817 = vmul.f32 %v1815, %v1815
          %v1818 = vsel %vm492, %v1816, 0.0
          %v1819 = vsel %vm492, %v1817, 0.0
          %v1820 = vadd.f32 %v1818, %v1819
          %1821 = vadd.xlane.f32.xlu0 %v1820
          %v1822 = vpop.xlane.xlu0 %1821
          %v1823 = vrot.slane %v1822, 4
          %v1824 = vadd.f32 %v1822, %v1823
          %v1825 = vrot.slane %v1824, 2
          %v1826 = vadd.f32 %v1824, %v1825
          %v1827 = vrot.slane %v1826, 1
          %v1828 = vadd.f32 %v1826, %v1827
          %s1829 = vtos %v1828
          %s1830 = smul.f32 %s1829, 0.0078125
          %s1831 = sadd.f32 %s1830, 1e-05
          %v1832 = vstv %s1831
          %v1833 = vrsqrt.pop %v1832
          %s1834 = vtos %v1833
          %v1835 = vstv %s1834
          %v1836 = vmul.f32 %v1814, %v1835
          %v1837 = vmul.f32 %v1815, %v1835
          %s1838 = sld [smem:[#allocation10 + $0x7]]
          %v1839 = vstv %s1838
          %v1840 = vmul.f32 %v1836, %v1839
          %v1841 = vmul.f32 %v1837, %v1839
          %s1842 = sld [smem:[#allocation12 + $0x7]]
          %v1843 = vstv %s1842
          %v1844 = vadd.f32 %v1840, %v1843
          %v1845 = vadd.f32 %v1841, %v1843
          %v1846 = vmax.f32 %v1844, 0.0
          %v1847 = vmax.f32 %v1845, 0.0
          %s1848 = scalar_lea.vmem [#allocation13], 56
          %1849 = vst.msk [vmem:[%s1848] sm:$0xff] %vm492, %v1846
          %1850 = vst.msk [vmem:[%s1848 + $0x40] sm:$0xff] %vm492, %v1847
        $region80: #{cdblock3_pallas.1} parent=51 // pred_fallthru
          _
        // Predicated region
        $region81: #{cdblock3_pallas.1} parent=51 // pred_check
          %p1851 = pneg %p209
        $region82: #{cdblock3_pallas.1} parent=51 // pred_check_branch
          %1853 = sbr.rel (%p1851) target = $region84
        $region83: #{cdblock3_pallas.1} parent=51 // pred_region
          %s1855 = ssub.s32 2048, 2048
          %1856 = vsyncadd [#allocation5], %s1855
          %s1857 = sshll.u32 [#allocation13], 4
          %s1858 = int_to_ptr.vmem [resolvable:$true] %s1857
          %1863 = dma.vmem_to_hbm [thread:$0]  %s1858, 2048, %s8, [#allocation5], 128, 128, 8
        $region84: #{cdblock3_pallas.1} parent=51 // pred_fallthru
          _
        // Predicated region
        $region85: #{cdblock3_pallas.1} parent=51 // pred_check
          %p1864 = pneg %p209
        $region86: #{cdblock3_pallas.1} parent=51 // pred_check_branch
          %1866 = sbr.rel (%p1864) target = $region88
        $region87: #{cdblock3_pallas.1} parent=51 // pred_region
          %1867 = dma.done [#allocation5], 2048
        $region88: #{cdblock3_pallas.1} parent=51 // pred_fallthru
          _
      $region52: #{cdblock3_pallas.1} parent=5 // pred_fallthru
        _
      %p1868 = scmp.le.s32.totalorder 2, %s18
      // Predicated region
      $region89: #{cdblock3_pallas.1} parent=5 // pred_check
        %p1869 = pneg %p1868
      $region90: #{cdblock3_pallas.1} parent=5 // pred_check_branch
        %1871 = sbr.rel (%p1869) target = $region92
      $region91: #{cdblock3_pallas.1} parent=5 // pred_region
        %s1872 = ssub.s32 %s18, 2
      $region92: #{cdblock3_pallas.1} parent=5 // pred_fallthru
        _
    $region6: #{cdblock3_pallas.1} parent=1 // loop_footer
      %s22 = sadd.s32 1, %s18
    $region7: #{cdblock3_pallas.1} parent=1 // loop_footer_branch
      %17 = sbr.rel target = $region3
    $region8: #{cdblock3_pallas.1} parent=1 // loop_exit
      _
    %1873 = vsyncpa [#allocation5], 1
    %s1874 = scalar_lea.sflag [#allocation5], 1
    %1875 = vsyncpa %s1874, 1
    %1876 = vsyncpa [#allocation6], 1
    %s1877 = scalar_lea.sflag [#allocation6], 1
    %1878 = vsyncpa %s1877, 1
    %1879 = vsyncpa [#allocation8], 1
    %1880 = vsyncpa [#allocation11], 1

</llo_original>
